<compile_context>
chip_gen: v6e
topology: v6e:2x2x1
jax: 0.10.0
libtpu: 0.0.40
codegen_flags: <defaults>
</compile_context>

<pallas_src>
import numpy as np
import jax
import jax.numpy as jnp
from jax.experimental import pallas as pl
from jax.experimental.pallas import tpu as pltpu

SAMPLES_PER_STRAND = 100
N_FFT = SAMPLES_PER_STRAND - 1          # 99
N_FREQ = N_FFT // 2 + 1                 # 50


def _dft_matrices(dtype=np.float64):
    """Real-valued (ortho-normalized) rfft / irfft bases."""
    n = N_FFT
    m = np.arange(n)
    k = np.arange(N_FREQ)
    ang = 2.0 * np.pi * np.outer(m, k) / n          # (99, 50)
    scale = 1.0 / np.sqrt(n)
    # forward:  F.real = x @ cosT ;  F.imag = x @ sinT        (x: (.., 99))
    cosT = (np.cos(ang) * scale).astype(dtype)                # (99, 50)
    sinT = (-np.sin(ang) * scale).astype(dtype)               # (99, 50)
    # inverse (Hermitian half-spectrum, DC imag ignored, no Nyquist for odd n):
    #   x = F.real @ icosT + F.imag @ isinT
    wr = np.where(k == 0, 1.0, 2.0) * scale                   # (50,)
    wi = np.where(k == 0, 0.0, 2.0) * scale
    icosT = (np.cos(ang) * wr).T.astype(dtype)                # (50, 99)
    isinT = (-np.sin(ang) * wi).T.astype(dtype)               # (50, 99)
    return cosT, sinT, icosT, isinT


def _fused_matrices(mean_shape, blend_shapes):
    """Fold DFT bases + mean_shape + blend_shapes into 2 matrices + 2 biases.

    Layout convention: x_flat[b, m*3 + c] = x[b, m, c]   (contiguous reshape)
                       out_flat[b, m*3 + c] = out[b, m, c]
    """
    mean = np.asarray(mean_shape, np.float64)                 # (50, 6)
    bs = np.asarray(blend_shapes, np.float64)                 # (K, 50, 6)
    K = bs.shape[0]
    cosT, sinT, icosT, isinT = _dft_matrices(np.float64)

    # Encode matrix E: (300, K).  Rows 297..299 (the 100th sample) stay zero
    # -> rfft(n=99) truncation is folded into the matrix.
    Er = (np.einsum('mk,nkc->mcn', cosT, bs[:, :, :3])
          + np.einsum('mk,nkc->mcn', sinT, bs[:, :, 3:]))      # (99, 3, K)
    E = np.zeros((SAMPLES_PER_STRAND * 3, K), np.float64)
    E[:N_FFT * 3, :] = Er.reshape(N_FFT * 3, K)

    # projection bias: -<mean_shape, blend_shapes[n]>
    proj_bias = -np.einsum('kj,nkj->n', mean, bs)[None, :]     # (1, K)

    # Decode matrix D: (K, 297) = blend_shapes . irfft basis
    Dr = (np.einsum('nkc,km->nmc', bs[:, :, :3], icosT)
          + np.einsum('nkc,km->nmc', bs[:, :, 3:], isinT))     # (K, 99, 3)
    D = Dr.reshape(K, N_FFT * 3)

    # output bias: mean_shape . irfft basis
    out_bias = (np.einsum('kc,km->mc', mean[:, :3], icosT)
                + np.einsum('kc,km->mc', mean[:, 3:], isinT)).reshape(1, N_FFT * 3)

    return (jnp.asarray(E, jnp.float32), jnp.asarray(proj_bias, jnp.float32),
            jnp.asarray(D, jnp.float32), jnp.asarray(out_bias, jnp.float32))


def strand_codec_kernel(x_ref, e_ref, pbias_ref, d_ref, obias_ref, out_ref):
    # x_ref:     (TB, 300)   flattened (100, 3) strand samples
    # e_ref:     (300, K)    fused rfft + mean-subtract + PCA-projection
    # pbias_ref: (1, K)
    # d_ref:     (K, 297)    fused PCA-blend + mean + irfft
    # obias_ref: (1, 297)
    # out_ref:   (TB, 297)   flattened (99, 3) output samples
    coeff = jnp.dot(x_ref[...], e_ref[...],
                    preferred_element_type=jnp.float32) + pbias_ref[...]
    out_ref[...] = jnp.dot(coeff, d_ref[...],
                           preferred_element_type=jnp.float32) + obias_ref[...]


def strand_codec_forward(x, mean_shape, blend_shapes, *, tb=512):
    """x: (B, 100, 3) f32; mean_shape: (50, 6); blend_shapes: (K, 50, 6).
    Returns (B, 99, 3) f32 (same as the PyTorch forward)."""
    B, S, C = x.shape
    assert S == SAMPLES_PER_STRAND and C == 3
    K = blend_shapes.shape[0]

    E, pbias, D, obias = _fused_matrices(mean_shape, blend_shapes)

    # Contiguous (free) reshape: x_flat[b, m*3 + c] == x[b, m, c].
    x_flat = jnp.reshape(x.astype(jnp.float32), (B, S * C))

    # Batch tiling: big tiles, >= 2 grid steps when possible (v7x megacore).
    if B <= tb:
        tb = B
        num_tiles = 1
    else:
        num_tiles = pl.cdiv(B, tb)
    B_pad = num_tiles * tb
    if B_pad != B:
        x_flat = jnp.pad(x_flat, ((0, B_pad - B), (0, 0)))

    out_flat = pl.pallas_call(
        strand_codec_kernel,
        out_shape=jax.ShapeDtypeStruct((B_pad, N_FFT * 3), jnp.float32),
        grid=(num_tiles,),
        in_specs=[
            pl.BlockSpec((tb, S * C), lambda i: (i, 0)),        # x tile
            pl.BlockSpec((S * C, K), lambda i: (0, 0)),         # E
            pl.BlockSpec((1, K), lambda i: (0, 0)),             # proj_bias
            pl.BlockSpec((K, N_FFT * 3), lambda i: (0, 0)),     # D
            pl.BlockSpec((1, N_FFT * 3), lambda i: (0, 0)),     # out_bias
        ],
        out_specs=pl.BlockSpec((tb, N_FFT * 3), lambda i: (i, 0)),
        compiler_params=pltpu.CompilerParams(
            dimension_semantics=("parallel",)),
    )(x_flat, E, pbias, D, obias)

    if B_pad != B:
        out_flat = out_flat[:B]
    # Contiguous (free) reshape back to (B, 99, 3).
    return jnp.reshape(out_flat, (B, N_FFT, 3))


def reference_forward(x, mean_shape, blend_shapes):
    """Pure-JAX reference using the original (un-fused) formulation, run at
    HIGHEST matmul precision so it is a tight f32 reference."""
    hp = jax.lax.Precision.HIGHEST
    cosT, sinT, icosT, isinT = (jnp.asarray(a, jnp.float32)
                                for a in _dft_matrices(np.float64))
    x99 = x[:, :N_FFT, :]                                          # (B, 99, 3)
    fr = jnp.einsum('bmc,mk->bkc', x99, cosT, precision=hp)
    fi = jnp.einsum('bmc,mk->bkc', x99, sinT, precision=hp)
    f = jnp.concatenate([fr, fi], axis=-1)                         # (B, 50, 6)
    d = f - mean_shape
    coeff = jnp.einsum('bkj,nkj->bn', d, blend_shapes, precision=hp)       # project
    g = mean_shape + jnp.einsum('bn,nkj->bkj', coeff, blend_shapes,
                                precision=hp)                              # blend
    out = (jnp.einsum('bkc,km->bmc', g[..., :3], icosT, precision=hp)
           + jnp.einsum('bkc,km->bmc', g[..., 3:], isinT, precision=hp))
    return out


if __name__ == "__main__":
    key = jax.random.PRNGKey(0)
    kx, km, kb = jax.random.split(key, 3)

    B, K = 1024, 64   # 2 grid steps at tb=512; input data is still tiny (~1.2 MB)
    x = jax.random.normal(kx, (B, SAMPLES_PER_STRAND, 3), jnp.float32)
    # deterministic synthetic "model" parameters (shapes implied by the module)
    mean_shape = 0.1 * jax.random.normal(km, (N_FREQ, 6), jnp.float32)
    blend_shapes = 0.1 * jax.random.normal(kb, (K, N_FREQ, 6), jnp.float32)

    out = strand_codec_forward(x, mean_shape, blend_shapes, tb=512)
    out = jax.block_until_ready(out)
    assert out.shape == (B, SAMPLES_PER_STRAND - 1, 3)

    ref = jax.block_until_ready(reference_forward(x, mean_shape, blend_shapes))
    # Tolerance tightened from 5e-2; remaining slack covers MXU bf16-pass
    # rounding of the f32 operands at these O(1) magnitudes.
    max_err = float(jnp.max(jnp.abs(out - ref)))
    assert jnp.allclose(out, ref, atol=2e-2, rtol=2e-2), (
        f"mismatch vs reference: max abs err {max_err}")

    print("KERNEL_OK")
</pallas_src>

<mosaic_0001>
module attributes {stable_mosaic.version = 11 : i64} {
  func.func @strand_codec_kernel(%arg0: i32, %arg1: memref<512x300xf32, #tpu.memory_space<vmem>>, %arg2: memref<300x64xf32, #tpu.memory_space<vmem>>, %arg3: memref<1x64xf32, #tpu.memory_space<vmem>>, %arg4: memref<64x297xf32, #tpu.memory_space<vmem>>, %arg5: memref<1x297xf32, #tpu.memory_space<vmem>>, %arg6: memref<512x297xf32, #tpu.memory_space<vmem>>) attributes {dimension_semantics = [#tpu.dimension_semantics<parallel>], iteration_bounds = array<i64: 2>, scalar_prefetch = 0 : i64, scratch_operands = 0 : i64, tpu.core_type = #tpu.core_type<tc>, window_params = [{transform_indices = @transform_0, window_bounds = array<i64: 512, 300>}, {pipeline_mode = #tpu.pipeline_mode<synchronous>, transform_indices = @transform_1, window_bounds = array<i64: 300, 64>}, {pipeline_mode = #tpu.pipeline_mode<synchronous>, transform_indices = @transform_2, window_bounds = array<i64: 1, 64>}, {pipeline_mode = #tpu.pipeline_mode<synchronous>, transform_indices = @transform_3, window_bounds = array<i64: 64, 297>}, {pipeline_mode = #tpu.pipeline_mode<synchronous>, transform_indices = @transform_4, window_bounds = array<i64: 1, 297>}, {transform_indices = @transform_5, window_bounds = array<i64: 512, 297>}]} {
    %c0 = arith.constant 0 : index
    %c0_0 = arith.constant 0 : index
    %0 = vector.load %arg1[%c0, %c0_0] : memref<512x300xf32, #tpu.memory_space<vmem>>, vector<512x300xf32>
    %c0_1 = arith.constant 0 : index
    %c0_2 = arith.constant 0 : index
    %1 = vector.load %arg2[%c0_1, %c0_2] : memref<300x64xf32, #tpu.memory_space<vmem>>, vector<300x64xf32>
    %cst = arith.constant dense<0.000000e+00> : vector<512x64xf32>
    %2 = tpu.matmul %0, %1, %cst {dimension_numbers = #tpu.dot_dimension_numbers<[1], [0], [0], [1], [0, 0, 1, 1], [], []>} : vector<512x300xf32>, vector<300x64xf32>, vector<512x64xf32> -> vector<512x64xf32>
    %c0_3 = arith.constant 0 : index
    %c0_4 = arith.constant 0 : index
    %3 = vector.load %arg3[%c0_3, %c0_4] : memref<1x64xf32, #tpu.memory_space<vmem>>, vector<1x64xf32>
    %4 = vector.broadcast %3 : vector<1x64xf32> to vector<512x64xf32>
    %5 = arith.addf %2, %4 : vector<512x64xf32>
    %c0_5 = arith.constant 0 : index
    %c0_6 = arith.constant 0 : index
    %6 = vector.load %arg4[%c0_5, %c0_6] : memref<64x297xf32, #tpu.memory_space<vmem>>, vector<64x297xf32>
    %cst_7 = arith.constant dense<0.000000e+00> : vector<512x297xf32>
    %7 = tpu.matmul %5, %6, %cst_7 {dimension_numbers = #tpu.dot_dimension_numbers<[1], [0], [0], [1], [0, 0, 1, 1], [], []>} : vector<512x64xf32>, vector<64x297xf32>, vector<512x297xf32> -> vector<512x297xf32>
    %c0_8 = arith.constant 0 : index
    %c0_9 = arith.constant 0 : index
    %8 = vector.load %arg5[%c0_8, %c0_9] : memref<1x297xf32, #tpu.memory_space<vmem>>, vector<1x297xf32>
    %9 = vector.broadcast %8 : vector<1x297xf32> to vector<512x297xf32>
    %10 = arith.addf %7, %9 : vector<512x297xf32>
    %c0_10 = arith.constant 0 : index
    %c0_11 = arith.constant 0 : index
    %11 = vector.load %arg6[%c0_10, %c0_11] : memref<512x297xf32, #tpu.memory_space<vmem>>, vector<512x297xf32>
    tpu.vector_store %arg6[%c0_10, %c0_11], %10 {strides = array<i32>} : memref<512x297xf32, #tpu.memory_space<vmem>>, vector<512x297xf32>,
    return
  }
  func.func @transform_0(%arg0: i32) -> (i32, i32) {
    %c0_i32 = arith.constant 0 : i32
    %c0_i32_0 = arith.constant 0 : i32
    return %arg0, %c0_i32 : i32, i32
  }
  func.func @transform_1(%arg0: i32) -> (i32, i32) {
    %c0_i32 = arith.constant 0 : i32
    %c0_i32_0 = arith.constant 0 : i32
    %c0_i32_1 = arith.constant 0 : i32
    return %c0_i32, %c0_i32_0 : i32, i32
  }
  func.func @transform_2(%arg0: i32) -> (i32, i32) {
    %c0_i32 = arith.constant 0 : i32
    %c0_i32_0 = arith.constant 0 : i32
    %c0_i32_1 = arith.constant 0 : i32
    return %c0_i32, %c0_i32_0 : i32, i32
  }
  func.func @transform_3(%arg0: i32) -> (i32, i32) {
    %c0_i32 = arith.constant 0 : i32
    %c0_i32_0 = arith.constant 0 : i32
    %c0_i32_1 = arith.constant 0 : i32
    return %c0_i32, %c0_i32_0 : i32, i32
  }
  func.func @transform_4(%arg0: i32) -> (i32, i32) {
    %c0_i32 = arith.constant 0 : i32
    %c0_i32_0 = arith.constant 0 : i32
    %c0_i32_1 = arith.constant 0 : i32
    return %c0_i32, %c0_i32_0 : i32, i32
  }
  func.func @transform_5(%arg0: i32) -> (i32, i32) {
    %c0_i32 = arith.constant 0 : i32
    %c0_i32_0 = arith.constant 0 : i32
    return %arg0, %c0_i32 : i32, i32
  }
}

</mosaic_0001>

<llo_original>
// kernel: tpu_custom_call.1
$region0: #{tpu_custom_call.1}
  #allocation0 [shape = 'u32[]', space=smem, size = 0x4, offset = 0x4, fixed_abs, tag = 'smem constant byte address 0x4 - core index']
  #allocation1 [shape = 'u32[144,128]{1,0:T(1,128)}', space=vmem, size = 0x12000, scoped, tag = 'internal scratch']
  %s0 = inlined_call_operand.vmem [shape: f32[1024,300], index: 0, kind: input, shape index: {}]
  %s1 = inlined_call_operand.vmem [shape: f32[300,64], index: 1, kind: input, shape index: {}]
  %s2 = inlined_call_operand.vmem [shape: f32[1,64], index: 2, kind: input, shape index: {}]
  %s3 = inlined_call_operand.vmem [shape: f32[64,297], index: 3, kind: input, shape index: {}]
  %s4 = inlined_call_operand.vmem [shape: f32[1,297], index: 4, kind: input, shape index: {}]
  %s5 = inlined_call_operand.vmem [shape: f32[1024,297], index: 5, kind: output, shape index: {}]
  %s6 = sld [smem:[#allocation0]]
  $region53: #{tpu_custom_call.1} parent=0
    _
  %s8 = ssub.s32 1, %s6
  %s9 = scalar_select 0, %s8, %s6
  loop: start=0, step=1, limit=4
  $region2: #{tpu_custom_call.1} parent=0 // loop_pre_header
    _
  $region3: #{tpu_custom_call.1} parent=0 // loop_header
    %s11 = sphi 0, %s15
    %p12 = scmp.ge.s32.totalorder %s11, 4
    %s21 = sphi 0, %s23
    %s24 = sphi 0, %s21
    %s25 = sphi 0, %s24
    %s41 = sphi 0, %s25
    %s45 = sphi 0, %s45
    %s47 = sphi 0, %s45
    %s48 = sphi 0, %s47
    %s62 = sphi 0, %s48
    %s66 = sphi 0, %s66
    %s68 = sphi 0, %s66
    %s69 = sphi 0, %s68
    %s83 = sphi 0, %s69
    %s87 = sphi 0, %s87
    %s89 = sphi 0, %s87
    %s90 = sphi 0, %s89
    %s104 = sphi 0, %s90
    %s108 = sphi 0, %s108
    %s110 = sphi 0, %s108
    %s111 = sphi 0, %s110
    %s125 = sphi 0, %s111
    %s131 = sphi 0, %s133
    %s134 = sphi 0, %s131
    %s135 = sphi 0, %s134
    %s151 = sphi 0, %s135
  $region4: #{tpu_custom_call.1} parent=0 // loop_header_branch
    %14 = sbr.rel (%p12) target = $region8
  $region5: #{tpu_custom_call.1} parent=0 // loop_body
    %s16 = ssub.s32 %s11, 1
    %s17 = ssub.s32 %s11, 2
    %s18 = sadd.s32 %s11, 1
    %s19 = ssub.s32 %s11, %s18
    %p20 = scmp.eq.s32.totalorder %s19, 0
    %s22 = sadd.s32 %s21, 1
    %s23 = scalar_select %p20, %s21, %s22
    %p26 = pneg %p20
    %p27 = scmp.eq.s32.totalorder %s11, 1
    %p28 = por %p26, %p27
    %p29 = scmp.ne.s32.totalorder %s21, %s24
    %p30 = scmp.eq.s32.totalorder %s11, 0
    %p31 = por %p29, %p30
    %p32 = scmp.ne.s32.totalorder %s21, %s24
    %p33 = scmp.eq.s32.totalorder %s16, 1
    %p34 = por %p32, %p33
    %p35 = scmp.ne.s32.totalorder %s24, %s25
    %p36 = scmp.eq.s32.totalorder %s16, 0
    %p37 = por %p35, %p36
    %p38 = scmp.ne.s32.totalorder %s24, %s25
    %p39 = scmp.eq.s32.totalorder %s17, 1
    %p40 = por %p38, %p39
    %p42 = scmp.ne.s32.totalorder %s25, %s41
    %p43 = scmp.eq.s32.totalorder %s17, 0
    %p44 = por %p42, %p43
    %s46 = sadd.s32 %s45, 1
    %p49 = scmp.eq.s32.totalorder %s11, 1
    %p50 = scmp.ne.s32.totalorder %s45, %s47
    %p51 = scmp.eq.s32.totalorder %s11, 0
    %p52 = por %p50, %p51
    %p53 = scmp.ne.s32.totalorder %s45, %s47
    %p54 = scmp.eq.s32.totalorder %s16, 1
    %p55 = por %p53, %p54
    %p56 = scmp.ne.s32.totalorder %s47, %s48
    %p57 = scmp.eq.s32.totalorder %s16, 0
    %p58 = por %p56, %p57
    %p59 = scmp.ne.s32.totalorder %s47, %s48
    %p60 = scmp.eq.s32.totalorder %s17, 1
    %p61 = por %p59, %p60
    %p63 = scmp.ne.s32.totalorder %s48, %s62
    %p64 = scmp.eq.s32.totalorder %s17, 0
    %p65 = por %p63, %p64
    %s67 = sadd.s32 %s66, 1
    %p70 = scmp.eq.s32.totalorder %s11, 1
    %p71 = scmp.ne.s32.totalorder %s66, %s68
    %p72 = scmp.eq.s32.totalorder %s11, 0
    %p73 = por %p71, %p72
    %p74 = scmp.ne.s32.totalorder %s66, %s68
    %p75 = scmp.eq.s32.totalorder %s16, 1
    %p76 = por %p74, %p75
    %p77 = scmp.ne.s32.totalorder %s68, %s69
    %p78 = scmp.eq.s32.totalorder %s16, 0
    %p79 = por %p77, %p78
    %p80 = scmp.ne.s32.totalorder %s68, %s69
    %p81 = scmp.eq.s32.totalorder %s17, 1
    %p82 = por %p80, %p81
    %p84 = scmp.ne.s32.totalorder %s69, %s83
    %p85 = scmp.eq.s32.totalorder %s17, 0
    %p86 = por %p84, %p85
    %s88 = sadd.s32 %s87, 1
    %p91 = scmp.eq.s32.totalorder %s11, 1
    %p92 = scmp.ne.s32.totalorder %s87, %s89
    %p93 = scmp.eq.s32.totalorder %s11, 0
    %p94 = por %p92, %p93
    %p95 = scmp.ne.s32.totalorder %s87, %s89
    %p96 = scmp.eq.s32.totalorder %s16, 1
    %p97 = por %p95, %p96
    %p98 = scmp.ne.s32.totalorder %s89, %s90
    %p99 = scmp.eq.s32.totalorder %s16, 0
    %p100 = por %p98, %p99
    %p101 = scmp.ne.s32.totalorder %s89, %s90
    %p102 = scmp.eq.s32.totalorder %s17, 1
    %p103 = por %p101, %p102
    %p105 = scmp.ne.s32.totalorder %s90, %s104
    %p106 = scmp.eq.s32.totalorder %s17, 0
    %p107 = por %p105, %p106
    %s109 = sadd.s32 %s108, 1
    %p112 = scmp.eq.s32.totalorder %s11, 1
    %p113 = scmp.ne.s32.totalorder %s108, %s110
    %p114 = scmp.eq.s32.totalorder %s11, 0
    %p115 = por %p113, %p114
    %p116 = scmp.ne.s32.totalorder %s108, %s110
    %p117 = scmp.eq.s32.totalorder %s16, 1
    %p118 = por %p116, %p117
    %p119 = scmp.ne.s32.totalorder %s110, %s111
    %p120 = scmp.eq.s32.totalorder %s16, 0
    %p121 = por %p119, %p120
    %p122 = scmp.ne.s32.totalorder %s110, %s111
    %p123 = scmp.eq.s32.totalorder %s17, 1
    %p124 = por %p122, %p123
    %p126 = scmp.ne.s32.totalorder %s111, %s125
    %p127 = scmp.eq.s32.totalorder %s17, 0
    %p128 = por %p126, %p127
    %s129 = ssub.s32 %s11, %s18
    %p130 = scmp.eq.s32.totalorder %s129, 0
    %s132 = sadd.s32 %s131, 1
    %s133 = scalar_select %p130, %s131, %s132
    %p136 = pneg %p130
    %p137 = scmp.eq.s32.totalorder %s11, 1
    %p138 = por %p136, %p137
    %p139 = scmp.ne.s32.totalorder %s131, %s134
    %p140 = scmp.eq.s32.totalorder %s11, 0
    %p141 = por %p139, %p140
    %p142 = scmp.ne.s32.totalorder %s131, %s134
    %p143 = scmp.eq.s32.totalorder %s16, 1
    %p144 = por %p142, %p143
    %p145 = scmp.ne.s32.totalorder %s134, %s135
    %p146 = scmp.eq.s32.totalorder %s16, 0
    %p147 = por %p145, %p146
    %p148 = scmp.ne.s32.totalorder %s134, %s135
    %p149 = scmp.eq.s32.totalorder %s17, 1
    %p150 = por %p148, %p149
    %p152 = scmp.ne.s32.totalorder %s135, %s151
    %p153 = scmp.eq.s32.totalorder %s17, 0
    %p154 = por %p152, %p153
    %p155 = scmp.le.s32.totalorder 1, %s11
    %p156 = scmp.lt.s32.totalorder %s11, 3
    %p157 = pnand %p155, %p156
    %p158 = pneg %p157
    // Predicated region
    $region9: #{tpu_custom_call.1} parent=5 // pred_check
      _
    $region10: #{tpu_custom_call.1} parent=5 // pred_check_branch
      %160 = sbr.rel (%p157) target = $region12
    $region11: #{tpu_custom_call.1} parent=5 // pred_region
      %s161 = ssub.s32 %s11, 1
      // Predicated region
      $region13: #{tpu_custom_call.1} parent=11 // pred_check
        %p162 = pneg %p58
      $region14: #{tpu_custom_call.1} parent=11 // pred_check_branch
        %164 = sbr.rel (%p162) target = $region16
      $region15: #{tpu_custom_call.1} parent=11 // pred_region
        _
      $region16: #{tpu_custom_call.1} parent=11 // pred_fallthru
        _
      // Predicated region
      $region17: #{tpu_custom_call.1} parent=11 // pred_check
        %p165 = pneg %p79
      $region18: #{tpu_custom_call.1} parent=11 // pred_check_branch
        %167 = sbr.rel (%p165) target = $region20
      $region19: #{tpu_custom_call.1} parent=11 // pred_region
        _
      $region20: #{tpu_custom_call.1} parent=11 // pred_fallthru
        _
      // Predicated region
      $region21: #{tpu_custom_call.1} parent=11 // pred_check
        %p168 = pneg %p100
      $region22: #{tpu_custom_call.1} parent=11 // pred_check_branch
        %170 = sbr.rel (%p168) target = $region24
      $region23: #{tpu_custom_call.1} parent=11 // pred_region
        _
      $region24: #{tpu_custom_call.1} parent=11 // pred_fallthru
        _
      // Predicated region
      $region25: #{tpu_custom_call.1} parent=11 // pred_check
        %p171 = pneg %p121
      $region26: #{tpu_custom_call.1} parent=11 // pred_check_branch
        %173 = sbr.rel (%p171) target = $region28
      $region27: #{tpu_custom_call.1} parent=11 // pred_region
        _
      $region28: #{tpu_custom_call.1} parent=11 // pred_fallthru
        _
    $region12: #{tpu_custom_call.1} parent=5 // pred_fallthru
      _
    %p174 = scmp.lt.s32.totalorder %s11, 2
    // Predicated region
    $region29: #{tpu_custom_call.1} parent=5 // pred_check
      %p175 = pneg %p174
    $region30: #{tpu_custom_call.1} parent=5 // pred_check_branch
      %177 = sbr.rel (%p175) target = $region32
    $region31: #{tpu_custom_call.1} parent=5 // pred_region
      // Predicated region
      $region33: #{tpu_custom_call.1} parent=31 // pred_check
        %p178 = pneg %p31
      $region34: #{tpu_custom_call.1} parent=31 // pred_check_branch
        %180 = sbr.rel (%p178) target = $region36
      $region35: #{tpu_custom_call.1} parent=31 // pred_region
        %s181 = smul.u32 64, %s11
        %p182 = scmp.lt.s32.totalorder %s181, 127
        %s183 = scalar_select %p182, %s181, 127
        %s184 = smul.addr %s183, 3
        %s185 = smul.addr %s184, 8
        %s186 = scalar_lea.vmem %s0, %s185
        %s187 = smul.u32 64, %s11
      $region36: #{tpu_custom_call.1} parent=31 // pred_fallthru
        _
    $region32: #{tpu_custom_call.1} parent=5 // pred_fallthru
      _
    %p188 = scmp.le.s32.totalorder 1, %s11
    %p189 = scmp.lt.s32.totalorder %s11, 3
    %p190 = pnand %p188, %p189
    %p191 = pneg %p190
    // Predicated region
    $region37: #{tpu_custom_call.1} parent=5 // pred_check
      _
    $region38: #{tpu_custom_call.1} parent=5 // pred_check_branch
      %193 = sbr.rel (%p190) target = $region40
    $region39: #{tpu_custom_call.1} parent=5 // pred_region
      %s194 = ssub.s32 %s11, 1
      %s195 = smul.u32 64, %s16
      %p196 = scmp.lt.s32.totalorder %s195, 127
      %s197 = scalar_select %p196, %s195, 127
      %s198 = smul.addr %s197, 3
      %s199 = smul.addr %s198, 8
      %s200 = scalar_lea.vmem %s0, %s199
      %p201 = pneg %p37
      %p202 = pneg %p34
      %p203 = pneg %p58
      %p204 = pneg %p55
      %p205 = pneg %p79
      %p206 = pneg %p76
      %p207 = pneg %p100
      %p208 = pneg %p97
      %p209 = pneg %p121
      %p210 = pneg %p118
      %p211 = pneg %p147
      %p212 = pneg %p144
      %s213 = smul.u32 64, %s16
      %p214 = scmp.lt.s32.totalorder %s213, 127
      %s215 = scalar_select %p214, %s213, 127
      %s216 = smul.addr %s215, 3
      %s217 = smul.addr %s216, 8
      %s218 = scalar_lea.vmem %s5, %s217
      %s219 = smul.u32 64, %s16
      %p220 = scmp.lt.s32.totalorder %s219, 127
      %s221 = scalar_select %p220, %s219, 127
      %s222 = smul.addr %s221, 3
      %s223 = smul.addr %s222, 8
      %s224 = scalar_lea.vmem %s0, %s223
      %s225 = smul.u32 64, %s16
      %s226 = smul.u32 64, %s16
      %p227 = scmp.lt.s32.totalorder %s226, 127
      %s228 = scalar_select %p227, %s226, 127
      %s229 = smul.addr %s228, 3
      %s230 = smul.addr %s229, 8
      %s231 = scalar_lea.vmem %s5, %s230
      %s232 = smul.u32 64, %s16
      %v233 = vld [vmem:[%s224] sm:$0xff]
      %v234 = vld [vmem:[%s224 + $0x8] sm:$0xff]
      %v235 = vld [vmem:[%s224 + $0x10] sm:$0xff]
      %v236 = vld [vmem:[%s224 + $0x18] sm:$0xff]
      %v237 = vld [vmem:[%s224 + $0x20] sm:$0xff]
      %v238 = vld [vmem:[%s224 + $0x28] sm:$0xff]
      %v239 = vld [vmem:[%s224 + $0x30] sm:$0xff]
      %v240 = vld [vmem:[%s224 + $0x38] sm:$0xff]
      %v241 = vld [vmem:[%s224 + $0x40] sm:$0xff]
      %v242 = vld [vmem:[%s224 + $0x48] sm:$0xff]
      %v243 = vld [vmem:[%s224 + $0x50] sm:$0xff]
      %v244 = vld [vmem:[%s224 + $0x58] sm:$0xff]
      %v245 = vld [vmem:[%s224 + $0x60] sm:$0xff]
      %v246 = vld [vmem:[%s224 + $0x68] sm:$0xff]
      %v247 = vld [vmem:[%s224 + $0x70] sm:$0xff]
      %v248 = vld [vmem:[%s224 + $0x78] sm:$0xff]
      %v249 = vld [vmem:[%s224 + $0x80] sm:$0xff]
      %v250 = vld [vmem:[%s224 + $0x88] sm:$0xff]
      %v251 = vld [vmem:[%s224 + $0x90] sm:$0xff]
      %v252 = vld [vmem:[%s224 + $0x98] sm:$0xff]
      %v253 = vld [vmem:[%s224 + $0xa0] sm:$0xff]
      %v254 = vld [vmem:[%s224 + $0xa8] sm:$0xff]
      %v255 = vld [vmem:[%s224 + $0xb0] sm:$0xff]
      %v256 = vld [vmem:[%s224 + $0xb8] sm:$0xff]
      %v257 = vld [vmem:[%s224 + $0xc0] sm:$0xff]
      %v258 = vld [vmem:[%s224 + $0xc8] sm:$0xff]
      %v259 = vld [vmem:[%s224 + $0xd0] sm:$0xff]
      %v260 = vld [vmem:[%s224 + $0xd8] sm:$0xff]
      %v261 = vld [vmem:[%s224 + $0xe0] sm:$0xff]
      %v262 = vld [vmem:[%s224 + $0xe8] sm:$0xff]
      %v263 = vld [vmem:[%s224 + $0xf0] sm:$0xff]
      %v264 = vld [vmem:[%s224 + $0xf8] sm:$0xff]
      %v265 = vld [vmem:[%s224 + $0x100] sm:$0xff]
      %v266 = vld [vmem:[%s224 + $0x108] sm:$0xff]
      %v267 = vld [vmem:[%s224 + $0x110] sm:$0xff]
      %v268 = vld [vmem:[%s224 + $0x118] sm:$0xff]
      %v269 = vld [vmem:[%s224 + $0x120] sm:$0xff]
      %v270 = vld [vmem:[%s224 + $0x128] sm:$0xff]
      %v271 = vld [vmem:[%s224 + $0x130] sm:$0xff]
      %v272 = vld [vmem:[%s224 + $0x138] sm:$0xff]
      %v273 = vld [vmem:[%s224 + $0x140] sm:$0xff]
      %v274 = vld [vmem:[%s224 + $0x148] sm:$0xff]
      %v275 = vld [vmem:[%s224 + $0x150] sm:$0xff]
      %v276 = vld [vmem:[%s224 + $0x158] sm:$0xff]
      %v277 = vld [vmem:[%s224 + $0x160] sm:$0xff]
      %v278 = vld [vmem:[%s224 + $0x168] sm:$0xff]
      %v279 = vld [vmem:[%s224 + $0x170] sm:$0xff]
      %v280 = vld [vmem:[%s224 + $0x178] sm:$0xff]
      %v281 = vld [vmem:[%s224 + $0x180] sm:$0xff]
      %v282 = vld [vmem:[%s224 + $0x188] sm:$0xff]
      %v283 = vld [vmem:[%s224 + $0x190] sm:$0xff]
      %v284 = vld [vmem:[%s224 + $0x198] sm:$0xff]
      %v285 = vld [vmem:[%s224 + $0x1a0] sm:$0xff]
      %v286 = vld [vmem:[%s224 + $0x1a8] sm:$0xff]
      %v287 = vld [vmem:[%s224 + $0x1b0] sm:$0xff]
      %v288 = vld [vmem:[%s224 + $0x1b8] sm:$0xff]
      %v289 = vld [vmem:[%s224 + $0x1c0] sm:$0xff]
      %v290 = vld [vmem:[%s224 + $0x1c8] sm:$0xff]
      %v291 = vld [vmem:[%s224 + $0x1d0] sm:$0xff]
      %v292 = vld [vmem:[%s224 + $0x1d8] sm:$0xff]
      %v293 = vld [vmem:[%s224 + $0x1e0] sm:$0xff]
      %v294 = vld [vmem:[%s224 + $0x1e8] sm:$0xff]
      %v295 = vld [vmem:[%s224 + $0x1f0] sm:$0xff]
      %v296 = vld [vmem:[%s224 + $0x1f8] sm:$0xff]
      %v297 = vld [vmem:[%s224 + $0x200] sm:$0xff]
      %v298 = vld [vmem:[%s224 + $0x208] sm:$0xff]
      %v299 = vld [vmem:[%s224 + $0x210] sm:$0xff]
      %v300 = vld [vmem:[%s224 + $0x218] sm:$0xff]
      %v301 = vld [vmem:[%s224 + $0x220] sm:$0xff]
      %v302 = vld [vmem:[%s224 + $0x228] sm:$0xff]
      %v303 = vld [vmem:[%s224 + $0x230] sm:$0xff]
      %v304 = vld [vmem:[%s224 + $0x238] sm:$0xff]
      %v305 = vld [vmem:[%s224 + $0x240] sm:$0xff]
      %v306 = vld [vmem:[%s224 + $0x248] sm:$0xff]
      %v307 = vld [vmem:[%s224 + $0x250] sm:$0xff]
      %v308 = vld [vmem:[%s224 + $0x258] sm:$0xff]
      %v309 = vld [vmem:[%s224 + $0x260] sm:$0xff]
      %v310 = vld [vmem:[%s224 + $0x268] sm:$0xff]
      %v311 = vld [vmem:[%s224 + $0x270] sm:$0xff]
      %v312 = vld [vmem:[%s224 + $0x278] sm:$0xff]
      %v313 = vld [vmem:[%s224 + $0x280] sm:$0xff]
      %v314 = vld [vmem:[%s224 + $0x288] sm:$0xff]
      %v315 = vld [vmem:[%s224 + $0x290] sm:$0xff]
      %v316 = vld [vmem:[%s224 + $0x298] sm:$0xff]
      %v317 = vld [vmem:[%s224 + $0x2a0] sm:$0xff]
      %v318 = vld [vmem:[%s224 + $0x2a8] sm:$0xff]
      %v319 = vld [vmem:[%s224 + $0x2b0] sm:$0xff]
      %v320 = vld [vmem:[%s224 + $0x2b8] sm:$0xff]
      %v321 = vld [vmem:[%s224 + $0x2c0] sm:$0xff]
      %v322 = vld [vmem:[%s224 + $0x2c8] sm:$0xff]
      %v323 = vld [vmem:[%s224 + $0x2d0] sm:$0xff]
      %v324 = vld [vmem:[%s224 + $0x2d8] sm:$0xff]
      %v325 = vld [vmem:[%s224 + $0x2e0] sm:$0xff]
      %v326 = vld [vmem:[%s224 + $0x2e8] sm:$0xff]
      %v327 = vld [vmem:[%s224 + $0x2f0] sm:$0xff]
      %v328 = vld [vmem:[%s224 + $0x2f8] sm:$0xff]
      %v329 = vld [vmem:[%s224 + $0x300] sm:$0xff]
      %v330 = vld [vmem:[%s224 + $0x308] sm:$0xff]
      %v331 = vld [vmem:[%s224 + $0x310] sm:$0xff]
      %v332 = vld [vmem:[%s224 + $0x318] sm:$0xff]
      %v333 = vld [vmem:[%s224 + $0x320] sm:$0xff]
      %v334 = vld [vmem:[%s224 + $0x328] sm:$0xff]
      %v335 = vld [vmem:[%s224 + $0x330] sm:$0xff]
      %v336 = vld [vmem:[%s224 + $0x338] sm:$0xff]
      %v337 = vld [vmem:[%s224 + $0x340] sm:$0xff]
      %v338 = vld [vmem:[%s224 + $0x348] sm:$0xff]
      %v339 = vld [vmem:[%s224 + $0x350] sm:$0xff]
      %v340 = vld [vmem:[%s224 + $0x358] sm:$0xff]
      %v341 = vld [vmem:[%s224 + $0x360] sm:$0xff]
      %v342 = vld [vmem:[%s224 + $0x368] sm:$0xff]
      %v343 = vld [vmem:[%s224 + $0x370] sm:$0xff]
      %v344 = vld [vmem:[%s224 + $0x378] sm:$0xff]
      %v345 = vld [vmem:[%s224 + $0x380] sm:$0xff]
      %v346 = vld [vmem:[%s224 + $0x388] sm:$0xff]
      %v347 = vld [vmem:[%s224 + $0x390] sm:$0xff]
      %v348 = vld [vmem:[%s224 + $0x398] sm:$0xff]
      %v349 = vld [vmem:[%s224 + $0x3a0] sm:$0xff]
      %v350 = vld [vmem:[%s224 + $0x3a8] sm:$0xff]
      %v351 = vld [vmem:[%s224 + $0x3b0] sm:$0xff]
      %v352 = vld [vmem:[%s224 + $0x3b8] sm:$0xff]
      %v353 = vld [vmem:[%s224 + $0x3c0] sm:$0xff]
      %v354 = vld [vmem:[%s224 + $0x3c8] sm:$0xff]
      %v355 = vld [vmem:[%s224 + $0x3d0] sm:$0xff]
      %v356 = vld [vmem:[%s224 + $0x3d8] sm:$0xff]
      %v357 = vld [vmem:[%s224 + $0x3e0] sm:$0xff]
      %v358 = vld [vmem:[%s224 + $0x3e8] sm:$0xff]
      %v359 = vld [vmem:[%s224 + $0x3f0] sm:$0xff]
      %v360 = vld [vmem:[%s224 + $0x3f8] sm:$0xff]
      %v361 = vld [vmem:[%s224 + $0x400] sm:$0xff]
      %v362 = vld [vmem:[%s224 + $0x408] sm:$0xff]
      %v363 = vld [vmem:[%s224 + $0x410] sm:$0xff]
      %v364 = vld [vmem:[%s224 + $0x418] sm:$0xff]
      %v365 = vld [vmem:[%s224 + $0x420] sm:$0xff]
      %v366 = vld [vmem:[%s224 + $0x428] sm:$0xff]
      %v367 = vld [vmem:[%s224 + $0x430] sm:$0xff]
      %v368 = vld [vmem:[%s224 + $0x438] sm:$0xff]
      %v369 = vld [vmem:[%s224 + $0x440] sm:$0xff]
      %v370 = vld [vmem:[%s224 + $0x448] sm:$0xff]
      %v371 = vld [vmem:[%s224 + $0x450] sm:$0xff]
      %v372 = vld [vmem:[%s224 + $0x458] sm:$0xff]
      %v373 = vld [vmem:[%s224 + $0x460] sm:$0xff]
      %v374 = vld [vmem:[%s224 + $0x468] sm:$0xff]
      %v375 = vld [vmem:[%s224 + $0x470] sm:$0xff]
      %v376 = vld [vmem:[%s224 + $0x478] sm:$0xff]
      %v377 = vld [vmem:[%s224 + $0x480] sm:$0xff]
      %v378 = vld [vmem:[%s224 + $0x488] sm:$0xff]
      %v379 = vld [vmem:[%s224 + $0x490] sm:$0xff]
      %v380 = vld [vmem:[%s224 + $0x498] sm:$0xff]
      %v381 = vld [vmem:[%s224 + $0x4a0] sm:$0xff]
      %v382 = vld [vmem:[%s224 + $0x4a8] sm:$0xff]
      %v383 = vld [vmem:[%s224 + $0x4b0] sm:$0xff]
      %v384 = vld [vmem:[%s224 + $0x4b8] sm:$0xff]
      %v385 = vld [vmem:[%s224 + $0x4c0] sm:$0xff]
      %v386 = vld [vmem:[%s224 + $0x4c8] sm:$0xff]
      %v387 = vld [vmem:[%s224 + $0x4d0] sm:$0xff]
      %v388 = vld [vmem:[%s224 + $0x4d8] sm:$0xff]
      %v389 = vld [vmem:[%s224 + $0x4e0] sm:$0xff]
      %v390 = vld [vmem:[%s224 + $0x4e8] sm:$0xff]
      %v391 = vld [vmem:[%s224 + $0x4f0] sm:$0xff]
      %v392 = vld [vmem:[%s224 + $0x4f8] sm:$0xff]
      %v393 = vld [vmem:[%s224 + $0x500] sm:$0xff]
      %v394 = vld [vmem:[%s224 + $0x508] sm:$0xff]
      %v395 = vld [vmem:[%s224 + $0x510] sm:$0xff]
      %v396 = vld [vmem:[%s224 + $0x518] sm:$0xff]
      %v397 = vld [vmem:[%s224 + $0x520] sm:$0xff]
      %v398 = vld [vmem:[%s224 + $0x528] sm:$0xff]
      %v399 = vld [vmem:[%s224 + $0x530] sm:$0xff]
      %v400 = vld [vmem:[%s224 + $0x538] sm:$0xff]
      %v401 = vld [vmem:[%s224 + $0x540] sm:$0xff]
      %v402 = vld [vmem:[%s224 + $0x548] sm:$0xff]
      %v403 = vld [vmem:[%s224 + $0x550] sm:$0xff]
      %v404 = vld [vmem:[%s224 + $0x558] sm:$0xff]
      %v405 = vld [vmem:[%s224 + $0x560] sm:$0xff]
      %v406 = vld [vmem:[%s224 + $0x568] sm:$0xff]
      %v407 = vld [vmem:[%s224 + $0x570] sm:$0xff]
      %v408 = vld [vmem:[%s224 + $0x578] sm:$0xff]
      %v409 = vld [vmem:[%s224 + $0x580] sm:$0xff]
      %v410 = vld [vmem:[%s224 + $0x588] sm:$0xff]
      %v411 = vld [vmem:[%s224 + $0x590] sm:$0xff]
      %v412 = vld [vmem:[%s224 + $0x598] sm:$0xff]
      %v413 = vld [vmem:[%s224 + $0x5a0] sm:$0xff]
      %v414 = vld [vmem:[%s224 + $0x5a8] sm:$0xff]
      %v415 = vld [vmem:[%s224 + $0x5b0] sm:$0xff]
      %v416 = vld [vmem:[%s224 + $0x5b8] sm:$0xff]
      %v417 = vld [vmem:[%s224 + $0x5c0] sm:$0xff]
      %v418 = vld [vmem:[%s224 + $0x5c8] sm:$0xff]
      %v419 = vld [vmem:[%s224 + $0x5d0] sm:$0xff]
      %v420 = vld [vmem:[%s224 + $0x5d8] sm:$0xff]
      %v421 = vld [vmem:[%s224 + $0x5e0] sm:$0xff]
      %v422 = vld [vmem:[%s224 + $0x5e8] sm:$0xff]
      %v423 = vld [vmem:[%s224 + $0x5f0] sm:$0xff]
      %v424 = vld [vmem:[%s224 + $0x5f8] sm:$0xff]
      %v425 = vld [vmem:[%s1] sm:$0xff]
      %v426 = vld [vmem:[%s1 + $0x8] sm:$0xff]
      %v427 = vld [vmem:[%s1 + $0x10] sm:$0xff]
      %v428 = vld [vmem:[%s1 + $0x18] sm:$0xff]
      %v429 = vld [vmem:[%s1 + $0x20] sm:$0xff]
      %v430 = vld [vmem:[%s1 + $0x28] sm:$0xff]
      %v431 = vld [vmem:[%s1 + $0x30] sm:$0xff]
      %v432 = vld [vmem:[%s1 + $0x38] sm:$0xff]
      %v433 = vld [vmem:[%s1 + $0x40] sm:$0xff]
      %v434 = vld [vmem:[%s1 + $0x48] sm:$0xff]
      %v435 = vld [vmem:[%s1 + $0x50] sm:$0xff]
      %v436 = vld [vmem:[%s1 + $0x58] sm:$0xff]
      %v437 = vld [vmem:[%s1 + $0x60] sm:$0xff]
      %v438 = vld [vmem:[%s1 + $0x68] sm:$0xff]
      %v439 = vld [vmem:[%s1 + $0x70] sm:$0xff]
      %v440 = vld [vmem:[%s1 + $0x78] sm:$0xff]
      %v441 = vld [vmem:[%s1 + $0x80] sm:$0xff]
      %v442 = vld [vmem:[%s1 + $0x88] sm:$0xff]
      %v443 = vld [vmem:[%s1 + $0x90] sm:$0xff]
      %v444 = vld [vmem:[%s1 + $0x98] sm:$0xff]
      %v445 = vld [vmem:[%s1 + $0xa0] sm:$0xff]
      %v446 = vld [vmem:[%s1 + $0xa8] sm:$0xff]
      %v447 = vld [vmem:[%s1 + $0xb0] sm:$0xff]
      %v448 = vld [vmem:[%s1 + $0xb8] sm:$0xff]
      %v449 = vld [vmem:[%s1 + $0xc0] sm:$0xff]
      %v450 = vld [vmem:[%s1 + $0xc8] sm:$0xff]
      %v451 = vld [vmem:[%s1 + $0xd0] sm:$0xff]
      %v452 = vld [vmem:[%s1 + $0xd8] sm:$0xff]
      %v453 = vld [vmem:[%s1 + $0xe0] sm:$0xff]
      %v454 = vld [vmem:[%s1 + $0xe8] sm:$0xff]
      %v455 = vld [vmem:[%s1 + $0xf0] sm:$0xff]
      %v456 = vld [vmem:[%s1 + $0xf8] sm:$0xff]
      %v457 = vld [vmem:[%s1 + $0x100] sm:$0xff]
      %v458 = vld [vmem:[%s1 + $0x108] sm:$0xff]
      %v459 = vld [vmem:[%s1 + $0x110] sm:$0xff]
      %v460 = vld [vmem:[%s1 + $0x118] sm:$0xff]
      %v461 = vld [vmem:[%s1 + $0x120] sm:$0xff]
      %v462 = vld [vmem:[%s1 + $0x128] sm:$0xf]
      %v463 = vld [vmem:[%s2] sm:$0x1]
      %v465 = vlaneseq
      %v466 = vshrl.u32 %v465, 7
      %v467 = vsub.s32 0, %v466
      %v468 = vrot.slane %v463, %v467
      %vm470 = vcmask 359424
      %v472 = vsel %vm470, %v235, 0
      %v475 = vsel %vm470, %v238, 0
      %v478 = vsel %vm470, %v241, 0
      %v481 = vsel %vm470, %v244, 0
      %v484 = vsel %vm470, %v247, 0
      %v487 = vsel %vm470, %v250, 0
      %v490 = vsel %vm470, %v253, 0
      %v493 = vsel %vm470, %v256, 0
      %v496 = vsel %vm470, %v259, 0
      %v499 = vsel %vm470, %v262, 0
      %v502 = vsel %vm470, %v265, 0
      %v505 = vsel %vm470, %v268, 0
      %v508 = vsel %vm470, %v271, 0
      %v511 = vsel %vm470, %v274, 0
      %v514 = vsel %vm470, %v277, 0
      %v517 = vsel %vm470, %v280, 0
      %v520 = vsel %vm470, %v283, 0
      %v523 = vsel %vm470, %v286, 0
      %v526 = vsel %vm470, %v289, 0
      %v529 = vsel %vm470, %v292, 0
      %v532 = vsel %vm470, %v295, 0
      %v535 = vsel %vm470, %v298, 0
      %v538 = vsel %vm470, %v301, 0
      %v541 = vsel %vm470, %v304, 0
      %v544 = vsel %vm470, %v307, 0
      %v547 = vsel %vm470, %v310, 0
      %v550 = vsel %vm470, %v313, 0
      %v553 = vsel %vm470, %v316, 0
      %v556 = vsel %vm470, %v319, 0
      %v559 = vsel %vm470, %v322, 0
      %v562 = vsel %vm470, %v325, 0
      %v565 = vsel %vm470, %v328, 0
      %v568 = vsel %vm470, %v331, 0
      %v571 = vsel %vm470, %v334, 0
      %v574 = vsel %vm470, %v337, 0
      %v577 = vsel %vm470, %v340, 0
      %v580 = vsel %vm470, %v343, 0
      %v583 = vsel %vm470, %v346, 0
      %v586 = vsel %vm470, %v349, 0
      %v589 = vsel %vm470, %v352, 0
      %v592 = vsel %vm470, %v355, 0
      %v595 = vsel %vm470, %v358, 0
      %v598 = vsel %vm470, %v361, 0
      %v601 = vsel %vm470, %v364, 0
      %v604 = vsel %vm470, %v367, 0
      %v607 = vsel %vm470, %v370, 0
      %v610 = vsel %vm470, %v373, 0
      %v613 = vsel %vm470, %v376, 0
      %v616 = vsel %vm470, %v379, 0
      %v619 = vsel %vm470, %v382, 0
      %v622 = vsel %vm470, %v385, 0
      %v625 = vsel %vm470, %v388, 0
      %v628 = vsel %vm470, %v391, 0
      %v631 = vsel %vm470, %v394, 0
      %v634 = vsel %vm470, %v397, 0
      %v637 = vsel %vm470, %v400, 0
      %v640 = vsel %vm470, %v403, 0
      %v643 = vsel %vm470, %v406, 0
      %v646 = vsel %vm470, %v409, 0
      %v649 = vsel %vm470, %v412, 0
      %v652 = vsel %vm470, %v415, 0
      %v655 = vsel %vm470, %v418, 0
      %v658 = vsel %vm470, %v421, 0
      %v661 = vsel %vm470, %v424, 0
      %vm663 = vcmask 1043456
      %v665 = vsel %vm663, %v462, 0
      %667 = vmatprep.subr.mxu0 0.0
      %668 = vmatpush1.msra.mxu0 %v440
      %669 = vmatprep.subr.mxu0 0.0
      %670 = vmatpush1.msra.mxu0 %v439
      %671 = vmatprep.subr.mxu0 0.0
      %672 = vmatpush1.msra.mxu0 %v438
      %673 = vmatprep.subr.mxu0 0.0
      %674 = vmatpush1.msra.mxu0 %v437
      %675 = vmatprep.subr.mxu0 0.0
      %676 = vmatpush1.msra.mxu0 %v436
      %677 = vmatprep.subr.mxu0 0.0
      %678 = vmatpush1.msra.mxu0 %v435
      %679 = vmatprep.subr.mxu0 0.0
      %680 = vmatpush1.msra.mxu0 %v434
      %681 = vmatprep.subr.mxu0 0.0
      %682 = vmatpush1.msra.mxu0 %v433
      %683 = vmatprep.subr.mxu0 0.0
      %684 = vmatpush1.msra.mxu0 %v432
      %685 = vmatprep.subr.mxu0 0.0
      %686 = vmatpush1.msra.mxu0 %v431
      %687 = vmatprep.subr.mxu0 0.0
      %688 = vmatpush1.msra.mxu0 %v430
      %689 = vmatprep.subr.mxu0 0.0
      %690 = vmatpush1.msra.mxu0 %v429
      %691 = vmatprep.subr.mxu0 0.0
      %692 = vmatpush1.msra.mxu0 %v428
      %693 = vmatprep.subr.mxu0 0.0
      %694 = vmatpush1.msra.mxu0 %v427
      %695 = vmatprep.subr.mxu0 0.0
      %696 = vmatpush1.msra.mxu0 %v426
      %697 = vmatprep.subr.mxu0 0.0
      %698 = vmatpush1.msra.mxu0 %v425
      %699 = vmatprep.subr.mxu0 0.0
      %700 = vmatpush2.msra.mxu0 %v456
      %701 = vmatprep.subr.mxu0 0.0
      %702 = vmatpush2.msra.mxu0 %v455
      %703 = vmatprep.subr.mxu0 0.0
      %704 = vmatpush2.msra.mxu0 %v454
      %705 = vmatprep.subr.mxu0 0.0
      %706 = vmatpush2.msra.mxu0 %v453
      %707 = vmatprep.subr.mxu0 0.0
      %708 = vmatpush2.msra.mxu0 %v452
      %709 = vmatprep.subr.mxu0 0.0
      %710 = vmatpush2.msra.mxu0 %v451
      %711 = vmatprep.subr.mxu0 0.0
      %712 = vmatpush2.msra.mxu0 %v450
      %713 = vmatprep.subr.mxu0 0.0
      %714 = vmatpush2.msra.mxu0 %v449
      %715 = vmatprep.subr.mxu0 0.0
      %716 = vmatpush2.msra.mxu0 %v448
      %717 = vmatprep.subr.mxu0 0.0
      %718 = vmatpush2.msra.mxu0 %v447
      %719 = vmatprep.subr.mxu0 0.0
      %720 = vmatpush2.msra.mxu0 %v446
      %721 = vmatprep.subr.mxu0 0.0
      %722 = vmatpush2.msra.mxu0 %v445
      %723 = vmatprep.subr.mxu0 0.0
      %724 = vmatpush2.msra.mxu0 %v444
      %725 = vmatprep.subr.mxu0 0.0
      %726 = vmatpush2.msra.mxu0 %v443
      %727 = vmatprep.subr.mxu0 0.0
      %728 = vmatpush2.msra.mxu0 %v442
      %729 = vmatprep.subr.mxu0 0.0
      %730 = vmatpush2.msra.mxu0 %v441
      %731 = vmatprep.mubr.f32.mxu0 %v234
      %732 = vmatmul.mubr.f32.gmra.mxu0 %v233
      %v733 = vpop.f32.mrf.mxu0
      %v734 = vadd.f32 %v468, %v733
      %v735 = vpop.f32.mrf.mxu0
      %736 = vmatprep.mubr.f32.mxu0 %v237
      %737 = vmatmul.mubr.f32.gmra.mxu0 %v236
      %v738 = vpop.f32.mrf.mxu0
      %v739 = vadd.f32 %v468, %v738
      %v740 = vpop.f32.mrf.mxu0
      %741 = vmatprep.mubr.f32.mxu0 %v240
      %742 = vmatmul.mubr.f32.gmra.mxu0 %v239
      %v743 = vpop.f32.mrf.mxu0
      %v744 = vadd.f32 %v468, %v743
      %v745 = vpop.f32.mrf.mxu0
      %746 = vmatprep.mubr.f32.mxu0 %v243
      %747 = vmatmul.mubr.f32.gmra.mxu0 %v242
      %v748 = vpop.f32.mrf.mxu0
      %v749 = vadd.f32 %v468, %v748
      %v750 = vpop.f32.mrf.mxu0
      %751 = vmatprep.mubr.f32.mxu0 %v246
      %752 = vmatmul.mubr.f32.gmra.mxu0 %v245
      %v753 = vpop.f32.mrf.mxu0
      %v754 = vadd.f32 %v468, %v753
      %v755 = vpop.f32.mrf.mxu0
      %756 = vmatprep.mubr.f32.mxu0 %v249
      %757 = vmatmul.mubr.f32.gmra.mxu0 %v248
      %v758 = vpop.f32.mrf.mxu0
      %v759 = vadd.f32 %v468, %v758
      %v760 = vpop.f32.mrf.mxu0
      %761 = vmatprep.mubr.f32.mxu0 %v252
      %762 = vmatmul.mubr.f32.gmra.mxu0 %v251
      %v763 = vpop.f32.mrf.mxu0
      %v764 = vadd.f32 %v468, %v763
      %v765 = vpop.f32.mrf.mxu0
      %766 = vmatprep.mubr.f32.mxu0 %v255
      %767 = vmatmul.mubr.f32.gmra.mxu0 %v254
      %v768 = vpop.f32.mrf.mxu0
      %v769 = vadd.f32 %v468, %v768
      %v770 = vpop.f32.mrf.mxu0
      %771 = vmatprep.mubr.f32.mxu0 %v258
      %772 = vmatmul.mubr.f32.gmra.mxu0 %v257
      %v773 = vpop.f32.mrf.mxu0
      %v774 = vadd.f32 %v468, %v773
      %v775 = vpop.f32.mrf.mxu0
      %776 = vmatprep.mubr.f32.mxu0 %v261
      %777 = vmatmul.mubr.f32.gmra.mxu0 %v260
      %v778 = vpop.f32.mrf.mxu0
      %v779 = vadd.f32 %v468, %v778
      %v780 = vpop.f32.mrf.mxu0
      %781 = vmatprep.mubr.f32.mxu0 %v264
      %782 = vmatmul.mubr.f32.gmra.mxu0 %v263
      %v783 = vpop.f32.mrf.mxu0
      %v784 = vadd.f32 %v468, %v783
      %v785 = vpop.f32.mrf.mxu0
      %786 = vmatprep.mubr.f32.mxu0 %v267
      %787 = vmatmul.mubr.f32.gmra.mxu0 %v266
      %v788 = vpop.f32.mrf.mxu0
      %v789 = vadd.f32 %v468, %v788
      %v790 = vpop.f32.mrf.mxu0
      %791 = vmatprep.mubr.f32.mxu0 %v270
      %792 = vmatmul.mubr.f32.gmra.mxu0 %v269
      %v793 = vpop.f32.mrf.mxu0
      %v794 = vadd.f32 %v468, %v793
      %v795 = vpop.f32.mrf.mxu0
      %796 = vmatprep.mubr.f32.mxu0 %v273
      %797 = vmatmul.mubr.f32.gmra.mxu0 %v272
      %v798 = vpop.f32.mrf.mxu0
      %v799 = vadd.f32 %v468, %v798
      %v800 = vpop.f32.mrf.mxu0
      %801 = vmatprep.mubr.f32.mxu0 %v276
      %802 = vmatmul.mubr.f32.gmra.mxu0 %v275
      %v803 = vpop.f32.mrf.mxu0
      %v804 = vadd.f32 %v468, %v803
      %v805 = vpop.f32.mrf.mxu0
      %806 = vmatprep.mubr.f32.mxu0 %v279
      %807 = vmatmul.mubr.f32.gmra.mxu0 %v278
      %v808 = vpop.f32.mrf.mxu0
      %v809 = vadd.f32 %v468, %v808
      %v810 = vpop.f32.mrf.mxu0
      %811 = vmatprep.mubr.f32.mxu0 %v282
      %812 = vmatmul.mubr.f32.gmra.mxu0 %v281
      %v813 = vpop.f32.mrf.mxu0
      %v814 = vadd.f32 %v468, %v813
      %v815 = vpop.f32.mrf.mxu0
      %816 = vmatprep.mubr.f32.mxu0 %v285
      %817 = vmatmul.mubr.f32.gmra.mxu0 %v284
      %v818 = vpop.f32.mrf.mxu0
      %v819 = vadd.f32 %v468, %v818
      %v820 = vpop.f32.mrf.mxu0
      %821 = vmatprep.mubr.f32.mxu0 %v288
      %822 = vmatmul.mubr.f32.gmra.mxu0 %v287
      %v823 = vpop.f32.mrf.mxu0
      %v824 = vadd.f32 %v468, %v823
      %v825 = vpop.f32.mrf.mxu0
      %826 = vmatprep.mubr.f32.mxu0 %v291
      %827 = vmatmul.mubr.f32.gmra.mxu0 %v290
      %v828 = vpop.f32.mrf.mxu0
      %v829 = vadd.f32 %v468, %v828
      %v830 = vpop.f32.mrf.mxu0
      %831 = vmatprep.mubr.f32.mxu0 %v294
      %832 = vmatmul.mubr.f32.gmra.mxu0 %v293
      %v833 = vpop.f32.mrf.mxu0
      %v834 = vadd.f32 %v468, %v833
      %v835 = vpop.f32.mrf.mxu0
      %836 = vmatprep.mubr.f32.mxu0 %v297
      %837 = vmatmul.mubr.f32.gmra.mxu0 %v296
      %v838 = vpop.f32.mrf.mxu0
      %v839 = vadd.f32 %v468, %v838
      %v840 = vpop.f32.mrf.mxu0
      %841 = vmatprep.mubr.f32.mxu0 %v300
      %842 = vmatmul.mubr.f32.gmra.mxu0 %v299
      %v843 = vpop.f32.mrf.mxu0
      %v844 = vadd.f32 %v468, %v843
      %v845 = vpop.f32.mrf.mxu0
      %846 = vmatprep.mubr.f32.mxu0 %v303
      %847 = vmatmul.mubr.f32.gmra.mxu0 %v302
      %v848 = vpop.f32.mrf.mxu0
      %v849 = vadd.f32 %v468, %v848
      %v850 = vpop.f32.mrf.mxu0
      %851 = vmatprep.mubr.f32.mxu0 %v306
      %852 = vmatmul.mubr.f32.gmra.mxu0 %v305
      %v853 = vpop.f32.mrf.mxu0
      %v854 = vadd.f32 %v468, %v853
      %v855 = vpop.f32.mrf.mxu0
      %856 = vmatprep.mubr.f32.mxu0 %v309
      %857 = vmatmul.mubr.f32.gmra.mxu0 %v308
      %v858 = vpop.f32.mrf.mxu0
      %v859 = vadd.f32 %v468, %v858
      %v860 = vpop.f32.mrf.mxu0
      %861 = vmatprep.mubr.f32.mxu0 %v312
      %862 = vmatmul.mubr.f32.gmra.mxu0 %v311
      %v863 = vpop.f32.mrf.mxu0
      %v864 = vadd.f32 %v468, %v863
      %v865 = vpop.f32.mrf.mxu0
      %866 = vmatprep.mubr.f32.mxu0 %v315
      %867 = vmatmul.mubr.f32.gmra.mxu0 %v314
      %v868 = vpop.f32.mrf.mxu0
      %v869 = vadd.f32 %v468, %v868
      %v870 = vpop.f32.mrf.mxu0
      %871 = vmatprep.mubr.f32.mxu0 %v318
      %872 = vmatmul.mubr.f32.gmra.mxu0 %v317
      %v873 = vpop.f32.mrf.mxu0
      %v874 = vadd.f32 %v468, %v873
      %v875 = vpop.f32.mrf.mxu0
      %876 = vmatprep.mubr.f32.mxu0 %v321
      %877 = vmatmul.mubr.f32.gmra.mxu0 %v320
      %v878 = vpop.f32.mrf.mxu0
      %v879 = vadd.f32 %v468, %v878
      %v880 = vpop.f32.mrf.mxu0
      %881 = vmatprep.mubr.f32.mxu0 %v324
      %882 = vmatmul.mubr.f32.gmra.mxu0 %v323
      %v883 = vpop.f32.mrf.mxu0
      %v884 = vadd.f32 %v468, %v883
      %v885 = vpop.f32.mrf.mxu0
      %886 = vmatprep.mubr.f32.mxu0 %v327
      %887 = vmatmul.mubr.f32.gmra.mxu0 %v326
      %v888 = vpop.f32.mrf.mxu0
      %v889 = vadd.f32 %v468, %v888
      %v890 = vpop.f32.mrf.mxu0
      %891 = vmatprep.mubr.f32.mxu0 %v330
      %892 = vmatmul.mubr.f32.gmra.mxu0 %v329
      %v893 = vpop.f32.mrf.mxu0
      %v894 = vadd.f32 %v468, %v893
      %v895 = vpop.f32.mrf.mxu0
      %896 = vmatprep.mubr.f32.mxu0 %v333
      %897 = vmatmul.mubr.f32.gmra.mxu0 %v332
      %v898 = vpop.f32.mrf.mxu0
      %v899 = vadd.f32 %v468, %v898
      %v900 = vpop.f32.mrf.mxu0
      %901 = vmatprep.mubr.f32.mxu0 %v336
      %902 = vmatmul.mubr.f32.gmra.mxu0 %v335
      %v903 = vpop.f32.mrf.mxu0
      %v904 = vadd.f32 %v468, %v903
      %v905 = vpop.f32.mrf.mxu0
      %906 = vmatprep.mubr.f32.mxu0 %v339
      %907 = vmatmul.mubr.f32.gmra.mxu0 %v338
      %v908 = vpop.f32.mrf.mxu0
      %v909 = vadd.f32 %v468, %v908
      %v910 = vpop.f32.mrf.mxu0
      %911 = vmatprep.mubr.f32.mxu0 %v342
      %912 = vmatmul.mubr.f32.gmra.mxu0 %v341
      %v913 = vpop.f32.mrf.mxu0
      %v914 = vadd.f32 %v468, %v913
      %v915 = vpop.f32.mrf.mxu0
      %916 = vmatprep.mubr.f32.mxu0 %v345
      %917 = vmatmul.mubr.f32.gmra.mxu0 %v344
      %v918 = vpop.f32.mrf.mxu0
      %v919 = vadd.f32 %v468, %v918
      %v920 = vpop.f32.mrf.mxu0
      %921 = vmatprep.mubr.f32.mxu0 %v348
      %922 = vmatmul.mubr.f32.gmra.mxu0 %v347
      %v923 = vpop.f32.mrf.mxu0
      %v924 = vadd.f32 %v468, %v923
      %v925 = vpop.f32.mrf.mxu0
      %926 = vmatprep.mubr.f32.mxu0 %v351
      %927 = vmatmul.mubr.f32.gmra.mxu0 %v350
      %v928 = vpop.f32.mrf.mxu0
      %v929 = vadd.f32 %v468, %v928
      %v930 = vpop.f32.mrf.mxu0
      %931 = vmatprep.mubr.f32.mxu0 %v354
      %932 = vmatmul.mubr.f32.gmra.mxu0 %v353
      %v933 = vpop.f32.mrf.mxu0
      %v934 = vadd.f32 %v468, %v933
      %v935 = vpop.f32.mrf.mxu0
      %936 = vmatprep.mubr.f32.mxu0 %v357
      %937 = vmatmul.mubr.f32.gmra.mxu0 %v356
      %v938 = vpop.f32.mrf.mxu0
      %v939 = vadd.f32 %v468, %v938
      %v940 = vpop.f32.mrf.mxu0
      %941 = vmatprep.mubr.f32.mxu0 %v360
      %942 = vmatmul.mubr.f32.gmra.mxu0 %v359
      %v943 = vpop.f32.mrf.mxu0
      %v944 = vadd.f32 %v468, %v943
      %v945 = vpop.f32.mrf.mxu0
      %946 = vmatprep.mubr.f32.mxu0 %v363
      %947 = vmatmul.mubr.f32.gmra.mxu0 %v362
      %v948 = vpop.f32.mrf.mxu0
      %v949 = vadd.f32 %v468, %v948
      %v950 = vpop.f32.mrf.mxu0
      %951 = vmatprep.mubr.f32.mxu0 %v366
      %952 = vmatmul.mubr.f32.gmra.mxu0 %v365
      %v953 = vpop.f32.mrf.mxu0
      %v954 = vadd.f32 %v468, %v953
      %v955 = vpop.f32.mrf.mxu0
      %956 = vmatprep.mubr.f32.mxu0 %v369
      %957 = vmatmul.mubr.f32.gmra.mxu0 %v368
      %v958 = vpop.f32.mrf.mxu0
      %v959 = vadd.f32 %v468, %v958
      %v960 = vpop.f32.mrf.mxu0
      %961 = vmatprep.mubr.f32.mxu0 %v372
      %962 = vmatmul.mubr.f32.gmra.mxu0 %v371
      %v963 = vpop.f32.mrf.mxu0
      %v964 = vadd.f32 %v468, %v963
      %v965 = vpop.f32.mrf.mxu0
      %966 = vmatprep.mubr.f32.mxu0 %v375
      %967 = vmatmul.mubr.f32.gmra.mxu0 %v374
      %v968 = vpop.f32.mrf.mxu0
      %v969 = vadd.f32 %v468, %v968
      %v970 = vpop.f32.mrf.mxu0
      %971 = vmatprep.mubr.f32.mxu0 %v378
      %972 = vmatmul.mubr.f32.gmra.mxu0 %v377
      %v973 = vpop.f32.mrf.mxu0
      %v974 = vadd.f32 %v468, %v973
      %v975 = vpop.f32.mrf.mxu0
      %976 = vmatprep.mubr.f32.mxu0 %v381
      %977 = vmatmul.mubr.f32.gmra.mxu0 %v380
      %v978 = vpop.f32.mrf.mxu0
      %v979 = vadd.f32 %v468, %v978
      %v980 = vpop.f32.mrf.mxu0
      %981 = vmatprep.mubr.f32.mxu0 %v384
      %982 = vmatmul.mubr.f32.gmra.mxu0 %v383
      %v983 = vpop.f32.mrf.mxu0
      %v984 = vadd.f32 %v468, %v983
      %v985 = vpop.f32.mrf.mxu0
      %986 = vmatprep.mubr.f32.mxu0 %v387
      %987 = vmatmul.mubr.f32.gmra.mxu0 %v386
      %v988 = vpop.f32.mrf.mxu0
      %v989 = vadd.f32 %v468, %v988
      %v990 = vpop.f32.mrf.mxu0
      %991 = vmatprep.mubr.f32.mxu0 %v390
      %992 = vmatmul.mubr.f32.gmra.mxu0 %v389
      %v993 = vpop.f32.mrf.mxu0
      %v994 = vadd.f32 %v468, %v993
      %v995 = vpop.f32.mrf.mxu0
      %996 = vmatprep.mubr.f32.mxu0 %v393
      %997 = vmatmul.mubr.f32.gmra.mxu0 %v392
      %v998 = vpop.f32.mrf.mxu0
      %v999 = vadd.f32 %v468, %v998
      %v1000 = vpop.f32.mrf.mxu0
      %1001 = vmatprep.mubr.f32.mxu0 %v396
      %1002 = vmatmul.mubr.f32.gmra.mxu0 %v395
      %v1003 = vpop.f32.mrf.mxu0
      %v1004 = vadd.f32 %v468, %v1003
      %v1005 = vpop.f32.mrf.mxu0
      %1006 = vmatprep.mubr.f32.mxu0 %v399
      %1007 = vmatmul.mubr.f32.gmra.mxu0 %v398
      %v1008 = vpop.f32.mrf.mxu0
      %v1009 = vadd.f32 %v468, %v1008
      %v1010 = vpop.f32.mrf.mxu0
      %1011 = vmatprep.mubr.f32.mxu0 %v402
      %1012 = vmatmul.mubr.f32.gmra.mxu0 %v401
      %v1013 = vpop.f32.mrf.mxu0
      %v1014 = vadd.f32 %v468, %v1013
      %v1015 = vpop.f32.mrf.mxu0
      %1016 = vmatprep.mubr.f32.mxu0 %v405
      %1017 = vmatmul.mubr.f32.gmra.mxu0 %v404
      %v1018 = vpop.f32.mrf.mxu0
      %v1019 = vadd.f32 %v468, %v1018
      %v1020 = vpop.f32.mrf.mxu0
      %1021 = vmatprep.mubr.f32.mxu0 %v408
      %1022 = vmatmul.mubr.f32.gmra.mxu0 %v407
      %v1023 = vpop.f32.mrf.mxu0
      %v1024 = vadd.f32 %v468, %v1023
      %v1025 = vpop.f32.mrf.mxu0
      %1026 = vmatprep.mubr.f32.mxu0 %v411
      %1027 = vmatmul.mubr.f32.gmra.mxu0 %v410
      %v1028 = vpop.f32.mrf.mxu0
      %v1029 = vadd.f32 %v468, %v1028
      %v1030 = vpop.f32.mrf.mxu0
      %1031 = vmatprep.mubr.f32.mxu0 %v414
      %1032 = vmatmul.mubr.f32.gmra.mxu0 %v413
      %v1033 = vpop.f32.mrf.mxu0
      %v1034 = vadd.f32 %v468, %v1033
      %v1035 = vpop.f32.mrf.mxu0
      %1036 = vmatprep.mubr.f32.mxu0 %v417
      %1037 = vmatmul.mubr.f32.gmra.mxu0 %v416
      %v1038 = vpop.f32.mrf.mxu0
      %v1039 = vadd.f32 %v468, %v1038
      %v1040 = vpop.f32.mrf.mxu0
      %1041 = vmatprep.mubr.f32.mxu0 %v420
      %1042 = vmatmul.mubr.f32.gmra.mxu0 %v419
      %v1043 = vpop.f32.mrf.mxu0
      %v1044 = vadd.f32 %v468, %v1043
      %v1045 = vpop.f32.mrf.mxu0
      %1046 = vmatprep.mubr.f32.mxu0 %v423
      %1047 = vmatmul.mubr.f32.gmra.mxu0 %v422
      %v1048 = vpop.f32.mrf.mxu0
      %v1049 = vadd.f32 %v468, %v1048
      %v1050 = vpop.f32.mrf.mxu0
      %1051 = vdwg.mxu0
      %1052 = vmatprep.subr.mxu0 0.0
      %1053 = vmatpush1.msra.mxu0 0.0
      %1054 = vmatprep.subr.mxu0 0.0
      %1055 = vmatpush1.msra.mxu0 0.0
      %1056 = vmatprep.subr.mxu0 0.0
      %1057 = vmatpush1.msra.mxu0 0.0
      %1058 = vmatprep.subr.mxu0 0.0
      %1059 = vmatpush1.msra.mxu0 0.0
      %1060 = vmatprep.subr.mxu0 0.0
      %1061 = vmatpush1.msra.mxu0 0.0
      %1062 = vmatprep.subr.mxu0 0.0
      %1063 = vmatpush1.msra.mxu0 0.0
      %1064 = vmatprep.subr.mxu0 0.0
      %1065 = vmatpush1.msra.mxu0 0.0
      %1066 = vmatprep.subr.mxu0 0.0
      %1067 = vmatpush1.msra.mxu0 0.0
      %1068 = vmatprep.subr.mxu0 0.0
      %1069 = vmatpush1.msra.mxu0 0.0
      %1070 = vmatprep.subr.mxu0 0.0
      %1071 = vmatpush1.msra.mxu0 0.0
      %1072 = vmatprep.subr.mxu0 0.0
      %1073 = vmatpush1.msra.mxu0 %v665
      %1074 = vmatprep.subr.mxu0 0.0
      %1075 = vmatpush1.msra.mxu0 %v461
      %1076 = vmatprep.subr.mxu0 0.0
      %1077 = vmatpush1.msra.mxu0 %v460
      %1078 = vmatprep.subr.mxu0 0.0
      %1079 = vmatpush1.msra.mxu0 %v459
      %1080 = vmatprep.subr.mxu0 0.0
      %1081 = vmatpush1.msra.mxu0 %v458
      %1082 = vmatprep.subr.mxu0 0.0
      %1083 = vmatpush1.msra.mxu0 %v457
      %1084 = vmatprep.subr.mxu0 0.0
      %1085 = vmatpush2.msra.mxu0 0.0
      %1086 = vmatprep.subr.mxu0 0.0
      %1087 = vmatpush2.msra.mxu0 0.0
      %1088 = vmatprep.subr.mxu0 0.0
      %1089 = vmatpush2.msra.mxu0 0.0
      %1090 = vmatprep.subr.mxu0 0.0
      %1091 = vmatpush2.msra.mxu0 0.0
      %1092 = vmatprep.subr.mxu0 0.0
      %1093 = vmatpush2.msra.mxu0 0.0
      %1094 = vmatprep.subr.mxu0 0.0
      %1095 = vmatpush2.msra.mxu0 0.0
      %1096 = vmatprep.subr.mxu0 0.0
      %1097 = vmatpush2.msra.mxu0 0.0
      %1098 = vmatprep.subr.mxu0 0.0
      %1099 = vmatpush2.msra.mxu0 0.0
      %1100 = vmatprep.subr.mxu0 0.0
      %1101 = vmatpush2.msra.mxu0 0.0
      %1102 = vmatprep.subr.mxu0 0.0
      %1103 = vmatpush2.msra.mxu0 0.0
      %1104 = vmatprep.subr.mxu0 0.0
      %1105 = vmatpush2.msra.mxu0 0.0
      %1106 = vmatprep.subr.mxu0 0.0
      %1107 = vmatpush2.msra.mxu0 0.0
      %1108 = vmatprep.subr.mxu0 0.0
      %1109 = vmatpush2.msra.mxu0 0.0
      %1110 = vmatprep.subr.mxu0 0.0
      %1111 = vmatpush2.msra.mxu0 0.0
      %1112 = vmatprep.subr.mxu0 0.0
      %1113 = vmatpush2.msra.mxu0 0.0
      %1114 = vmatprep.subr.mxu0 0.0
      %1115 = vmatpush2.msra.mxu0 0.0
      %1116 = vmatprep.mubr.f32.mxu0 0.0
      %1117 = vmatmul.mubr.f32.gmra.mxu0 %v472
      %v1118 = vpop.f32.mrf.mxu0
      %v1119 = vadd.f32 %v734, %v1118
      %v1120 = vpop.f32.mrf.mxu0
      %1121 = vmatprep.mubr.f32.mxu0 0.0
      %1122 = vmatmul.mubr.f32.gmra.mxu0 %v475
      %v1123 = vpop.f32.mrf.mxu0
      %v1124 = vadd.f32 %v739, %v1123
      %v1125 = vpop.f32.mrf.mxu0
      %1126 = vmatprep.mubr.f32.mxu0 0.0
      %1127 = vmatmul.mubr.f32.gmra.mxu0 %v478
      %v1128 = vpop.f32.mrf.mxu0
      %v1129 = vadd.f32 %v744, %v1128
      %v1130 = vpop.f32.mrf.mxu0
      %1131 = vmatprep.mubr.f32.mxu0 0.0
      %1132 = vmatmul.mubr.f32.gmra.mxu0 %v481
      %v1133 = vpop.f32.mrf.mxu0
      %v1134 = vadd.f32 %v749, %v1133
      %v1135 = vpop.f32.mrf.mxu0
      %1136 = vmatprep.mubr.f32.mxu0 0.0
      %1137 = vmatmul.mubr.f32.gmra.mxu0 %v484
      %v1138 = vpop.f32.mrf.mxu0
      %v1139 = vadd.f32 %v754, %v1138
      %v1140 = vpop.f32.mrf.mxu0
      %1141 = vmatprep.mubr.f32.mxu0 0.0
      %1142 = vmatmul.mubr.f32.gmra.mxu0 %v487
      %v1143 = vpop.f32.mrf.mxu0
      %v1144 = vadd.f32 %v759, %v1143
      %v1145 = vpop.f32.mrf.mxu0
      %1146 = vmatprep.mubr.f32.mxu0 0.0
      %1147 = vmatmul.mubr.f32.gmra.mxu0 %v490
      %v1148 = vpop.f32.mrf.mxu0
      %v1149 = vadd.f32 %v764, %v1148
      %v1150 = vpop.f32.mrf.mxu0
      %1151 = vmatprep.mubr.f32.mxu0 0.0
      %1152 = vmatmul.mubr.f32.gmra.mxu0 %v493
      %v1153 = vpop.f32.mrf.mxu0
      %v1154 = vadd.f32 %v769, %v1153
      %v1155 = vpop.f32.mrf.mxu0
      %1156 = vmatprep.mubr.f32.mxu0 0.0
      %1157 = vmatmul.mubr.f32.gmra.mxu0 %v496
      %v1158 = vpop.f32.mrf.mxu0
      %v1159 = vadd.f32 %v774, %v1158
      %v1160 = vpop.f32.mrf.mxu0
      %1161 = vmatprep.mubr.f32.mxu0 0.0
      %1162 = vmatmul.mubr.f32.gmra.mxu0 %v499
      %v1163 = vpop.f32.mrf.mxu0
      %v1164 = vadd.f32 %v779, %v1163
      %v1165 = vpop.f32.mrf.mxu0
      %1166 = vmatprep.mubr.f32.mxu0 0.0
      %1167 = vmatmul.mubr.f32.gmra.mxu0 %v502
      %v1168 = vpop.f32.mrf.mxu0
      %v1169 = vadd.f32 %v784, %v1168
      %v1170 = vpop.f32.mrf.mxu0
      %1171 = vmatprep.mubr.f32.mxu0 0.0
      %1172 = vmatmul.mubr.f32.gmra.mxu0 %v505
      %v1173 = vpop.f32.mrf.mxu0
      %v1174 = vadd.f32 %v789, %v1173
      %v1175 = vpop.f32.mrf.mxu0
      %1176 = vmatprep.mubr.f32.mxu0 0.0
      %1177 = vmatmul.mubr.f32.gmra.mxu0 %v508
      %v1178 = vpop.f32.mrf.mxu0
      %v1179 = vadd.f32 %v794, %v1178
      %v1180 = vpop.f32.mrf.mxu0
      %1181 = vmatprep.mubr.f32.mxu0 0.0
      %1182 = vmatmul.mubr.f32.gmra.mxu0 %v511
      %v1183 = vpop.f32.mrf.mxu0
      %v1184 = vadd.f32 %v799, %v1183
      %v1185 = vpop.f32.mrf.mxu0
      %1186 = vmatprep.mubr.f32.mxu0 0.0
      %1187 = vmatmul.mubr.f32.gmra.mxu0 %v514
      %v1188 = vpop.f32.mrf.mxu0
      %v1189 = vadd.f32 %v804, %v1188
      %v1190 = vpop.f32.mrf.mxu0
      %1191 = vmatprep.mubr.f32.mxu0 0.0
      %1192 = vmatmul.mubr.f32.gmra.mxu0 %v517
      %v1193 = vpop.f32.mrf.mxu0
      %v1194 = vadd.f32 %v809, %v1193
      %v1195 = vpop.f32.mrf.mxu0
      %1196 = vmatprep.mubr.f32.mxu0 0.0
      %1197 = vmatmul.mubr.f32.gmra.mxu0 %v520
      %v1198 = vpop.f32.mrf.mxu0
      %v1199 = vadd.f32 %v814, %v1198
      %v1200 = vpop.f32.mrf.mxu0
      %1201 = vmatprep.mubr.f32.mxu0 0.0
      %1202 = vmatmul.mubr.f32.gmra.mxu0 %v523
      %v1203 = vpop.f32.mrf.mxu0
      %v1204 = vadd.f32 %v819, %v1203
      %v1205 = vpop.f32.mrf.mxu0
      %1206 = vmatprep.mubr.f32.mxu0 0.0
      %1207 = vmatmul.mubr.f32.gmra.mxu0 %v526
      %v1208 = vpop.f32.mrf.mxu0
      %v1209 = vadd.f32 %v824, %v1208
      %v1210 = vpop.f32.mrf.mxu0
      %1211 = vmatprep.mubr.f32.mxu0 0.0
      %1212 = vmatmul.mubr.f32.gmra.mxu0 %v529
      %v1213 = vpop.f32.mrf.mxu0
      %v1214 = vadd.f32 %v829, %v1213
      %v1215 = vpop.f32.mrf.mxu0
      %1216 = vmatprep.mubr.f32.mxu0 0.0
      %1217 = vmatmul.mubr.f32.gmra.mxu0 %v532
      %v1218 = vpop.f32.mrf.mxu0
      %v1219 = vadd.f32 %v834, %v1218
      %v1220 = vpop.f32.mrf.mxu0
      %1221 = vmatprep.mubr.f32.mxu0 0.0
      %1222 = vmatmul.mubr.f32.gmra.mxu0 %v535
      %v1223 = vpop.f32.mrf.mxu0
      %v1224 = vadd.f32 %v839, %v1223
      %v1225 = vpop.f32.mrf.mxu0
      %1226 = vmatprep.mubr.f32.mxu0 0.0
      %1227 = vmatmul.mubr.f32.gmra.mxu0 %v538
      %v1228 = vpop.f32.mrf.mxu0
      %v1229 = vadd.f32 %v844, %v1228
      %v1230 = vpop.f32.mrf.mxu0
      %1231 = vmatprep.mubr.f32.mxu0 0.0
      %1232 = vmatmul.mubr.f32.gmra.mxu0 %v541
      %v1233 = vpop.f32.mrf.mxu0
      %v1234 = vadd.f32 %v849, %v1233
      %v1235 = vpop.f32.mrf.mxu0
      %1236 = vmatprep.mubr.f32.mxu0 0.0
      %1237 = vmatmul.mubr.f32.gmra.mxu0 %v544
      %v1238 = vpop.f32.mrf.mxu0
      %v1239 = vadd.f32 %v854, %v1238
      %v1240 = vpop.f32.mrf.mxu0
      %1241 = vmatprep.mubr.f32.mxu0 0.0
      %1242 = vmatmul.mubr.f32.gmra.mxu0 %v547
      %v1243 = vpop.f32.mrf.mxu0
      %v1244 = vadd.f32 %v859, %v1243
      %v1245 = vpop.f32.mrf.mxu0
      %1246 = vmatprep.mubr.f32.mxu0 0.0
      %1247 = vmatmul.mubr.f32.gmra.mxu0 %v550
      %v1248 = vpop.f32.mrf.mxu0
      %v1249 = vadd.f32 %v864, %v1248
      %v1250 = vpop.f32.mrf.mxu0
      %1251 = vmatprep.mubr.f32.mxu0 0.0
      %1252 = vmatmul.mubr.f32.gmra.mxu0 %v553
      %v1253 = vpop.f32.mrf.mxu0
      %v1254 = vadd.f32 %v869, %v1253
      %v1255 = vpop.f32.mrf.mxu0
      %1256 = vmatprep.mubr.f32.mxu0 0.0
      %1257 = vmatmul.mubr.f32.gmra.mxu0 %v556
      %v1258 = vpop.f32.mrf.mxu0
      %v1259 = vadd.f32 %v874, %v1258
      %v1260 = vpop.f32.mrf.mxu0
      %1261 = vmatprep.mubr.f32.mxu0 0.0
      %1262 = vmatmul.mubr.f32.gmra.mxu0 %v559
      %v1263 = vpop.f32.mrf.mxu0
      %v1264 = vadd.f32 %v879, %v1263
      %v1265 = vpop.f32.mrf.mxu0
      %1266 = vmatprep.mubr.f32.mxu0 0.0
      %1267 = vmatmul.mubr.f32.gmra.mxu0 %v562
      %v1268 = vpop.f32.mrf.mxu0
      %v1269 = vadd.f32 %v884, %v1268
      %v1270 = vpop.f32.mrf.mxu0
      %1271 = vmatprep.mubr.f32.mxu0 0.0
      %1272 = vmatmul.mubr.f32.gmra.mxu0 %v565
      %v1273 = vpop.f32.mrf.mxu0
      %v1274 = vadd.f32 %v889, %v1273
      %v1275 = vpop.f32.mrf.mxu0
      %1276 = vmatprep.mubr.f32.mxu0 0.0
      %1277 = vmatmul.mubr.f32.gmra.mxu0 %v568
      %v1278 = vpop.f32.mrf.mxu0
      %v1279 = vadd.f32 %v894, %v1278
      %v1280 = vpop.f32.mrf.mxu0
      %1281 = vmatprep.mubr.f32.mxu0 0.0
      %1282 = vmatmul.mubr.f32.gmra.mxu0 %v571
      %v1283 = vpop.f32.mrf.mxu0
      %v1284 = vadd.f32 %v899, %v1283
      %v1285 = vpop.f32.mrf.mxu0
      %1286 = vmatprep.mubr.f32.mxu0 0.0
      %1287 = vmatmul.mubr.f32.gmra.mxu0 %v574
      %v1288 = vpop.f32.mrf.mxu0
      %v1289 = vadd.f32 %v904, %v1288
      %v1290 = vpop.f32.mrf.mxu0
      %1291 = vmatprep.mubr.f32.mxu0 0.0
      %1292 = vmatmul.mubr.f32.gmra.mxu0 %v577
      %v1293 = vpop.f32.mrf.mxu0
      %v1294 = vadd.f32 %v909, %v1293
      %v1295 = vpop.f32.mrf.mxu0
      %1296 = vmatprep.mubr.f32.mxu0 0.0
      %1297 = vmatmul.mubr.f32.gmra.mxu0 %v580
      %v1298 = vpop.f32.mrf.mxu0
      %v1299 = vadd.f32 %v914, %v1298
      %v1300 = vpop.f32.mrf.mxu0
      %1301 = vmatprep.mubr.f32.mxu0 0.0
      %1302 = vmatmul.mubr.f32.gmra.mxu0 %v583
      %v1303 = vpop.f32.mrf.mxu0
      %v1304 = vadd.f32 %v919, %v1303
      %v1305 = vpop.f32.mrf.mxu0
      %1306 = vmatprep.mubr.f32.mxu0 0.0
      %1307 = vmatmul.mubr.f32.gmra.mxu0 %v586
      %v1308 = vpop.f32.mrf.mxu0
      %v1309 = vadd.f32 %v924, %v1308
      %v1310 = vpop.f32.mrf.mxu0
      %1311 = vmatprep.mubr.f32.mxu0 0.0
      %1312 = vmatmul.mubr.f32.gmra.mxu0 %v589
      %v1313 = vpop.f32.mrf.mxu0
      %v1314 = vadd.f32 %v929, %v1313
      %v1315 = vpop.f32.mrf.mxu0
      %1316 = vmatprep.mubr.f32.mxu0 0.0
      %1317 = vmatmul.mubr.f32.gmra.mxu0 %v592
      %v1318 = vpop.f32.mrf.mxu0
      %v1319 = vadd.f32 %v934, %v1318
      %v1320 = vpop.f32.mrf.mxu0
      %1321 = vmatprep.mubr.f32.mxu0 0.0
      %1322 = vmatmul.mubr.f32.gmra.mxu0 %v595
      %v1323 = vpop.f32.mrf.mxu0
      %v1324 = vadd.f32 %v939, %v1323
      %v1325 = vpop.f32.mrf.mxu0
      %1326 = vmatprep.mubr.f32.mxu0 0.0
      %1327 = vmatmul.mubr.f32.gmra.mxu0 %v598
      %v1328 = vpop.f32.mrf.mxu0
      %v1329 = vadd.f32 %v944, %v1328
      %v1330 = vpop.f32.mrf.mxu0
      %1331 = vmatprep.mubr.f32.mxu0 0.0
      %1332 = vmatmul.mubr.f32.gmra.mxu0 %v601
      %v1333 = vpop.f32.mrf.mxu0
      %v1334 = vadd.f32 %v949, %v1333
      %v1335 = vpop.f32.mrf.mxu0
      %1336 = vmatprep.mubr.f32.mxu0 0.0
      %1337 = vmatmul.mubr.f32.gmra.mxu0 %v604
      %v1338 = vpop.f32.mrf.mxu0
      %v1339 = vadd.f32 %v954, %v1338
      %v1340 = vpop.f32.mrf.mxu0
      %1341 = vmatprep.mubr.f32.mxu0 0.0
      %1342 = vmatmul.mubr.f32.gmra.mxu0 %v607
      %v1343 = vpop.f32.mrf.mxu0
      %v1344 = vadd.f32 %v959, %v1343
      %v1345 = vpop.f32.mrf.mxu0
      %1346 = vmatprep.mubr.f32.mxu0 0.0
      %1347 = vmatmul.mubr.f32.gmra.mxu0 %v610
      %v1348 = vpop.f32.mrf.mxu0
      %v1349 = vadd.f32 %v964, %v1348
      %v1350 = vpop.f32.mrf.mxu0
      %1351 = vmatprep.mubr.f32.mxu0 0.0
      %1352 = vmatmul.mubr.f32.gmra.mxu0 %v613
      %v1353 = vpop.f32.mrf.mxu0
      %v1354 = vadd.f32 %v969, %v1353
      %v1355 = vpop.f32.mrf.mxu0
      %1356 = vmatprep.mubr.f32.mxu0 0.0
      %1357 = vmatmul.mubr.f32.gmra.mxu0 %v616
      %v1358 = vpop.f32.mrf.mxu0
      %v1359 = vadd.f32 %v974, %v1358
      %v1360 = vpop.f32.mrf.mxu0
      %1361 = vmatprep.mubr.f32.mxu0 0.0
      %1362 = vmatmul.mubr.f32.gmra.mxu0 %v619
      %v1363 = vpop.f32.mrf.mxu0
      %v1364 = vadd.f32 %v979, %v1363
      %v1365 = vpop.f32.mrf.mxu0
      %1366 = vmatprep.mubr.f32.mxu0 0.0
      %1367 = vmatmul.mubr.f32.gmra.mxu0 %v622
      %v1368 = vpop.f32.mrf.mxu0
      %v1369 = vadd.f32 %v984, %v1368
      %v1370 = vpop.f32.mrf.mxu0
      %1371 = vmatprep.mubr.f32.mxu0 0.0
      %1372 = vmatmul.mubr.f32.gmra.mxu0 %v625
      %v1373 = vpop.f32.mrf.mxu0
      %v1374 = vadd.f32 %v989, %v1373
      %v1375 = vpop.f32.mrf.mxu0
      %1376 = vmatprep.mubr.f32.mxu0 0.0
      %1377 = vmatmul.mubr.f32.gmra.mxu0 %v628
      %v1378 = vpop.f32.mrf.mxu0
      %v1379 = vadd.f32 %v994, %v1378
      %v1380 = vpop.f32.mrf.mxu0
      %1381 = vmatprep.mubr.f32.mxu0 0.0
      %1382 = vmatmul.mubr.f32.gmra.mxu0 %v631
      %v1383 = vpop.f32.mrf.mxu0
      %v1384 = vadd.f32 %v999, %v1383
      %v1385 = vpop.f32.mrf.mxu0
      %1386 = vmatprep.mubr.f32.mxu0 0.0
      %1387 = vmatmul.mubr.f32.gmra.mxu0 %v634
      %v1388 = vpop.f32.mrf.mxu0
      %v1389 = vadd.f32 %v1004, %v1388
      %v1390 = vpop.f32.mrf.mxu0
      %1391 = vmatprep.mubr.f32.mxu0 0.0
      %1392 = vmatmul.mubr.f32.gmra.mxu0 %v637
      %v1393 = vpop.f32.mrf.mxu0
      %v1394 = vadd.f32 %v1009, %v1393
      %v1395 = vpop.f32.mrf.mxu0
      %1396 = vmatprep.mubr.f32.mxu0 0.0
      %1397 = vmatmul.mubr.f32.gmra.mxu0 %v640
      %v1398 = vpop.f32.mrf.mxu0
      %v1399 = vadd.f32 %v1014, %v1398
      %v1400 = vpop.f32.mrf.mxu0
      %1401 = vmatprep.mubr.f32.mxu0 0.0
      %1402 = vmatmul.mubr.f32.gmra.mxu0 %v643
      %v1403 = vpop.f32.mrf.mxu0
      %v1404 = vadd.f32 %v1019, %v1403
      %v1405 = vpop.f32.mrf.mxu0
      %1406 = vmatprep.mubr.f32.mxu0 0.0
      %1407 = vmatmul.mubr.f32.gmra.mxu0 %v646
      %v1408 = vpop.f32.mrf.mxu0
      %v1409 = vadd.f32 %v1024, %v1408
      %v1410 = vpop.f32.mrf.mxu0
      %1411 = vmatprep.mubr.f32.mxu0 0.0
      %1412 = vmatmul.mubr.f32.gmra.mxu0 %v649
      %v1413 = vpop.f32.mrf.mxu0
      %v1414 = vadd.f32 %v1029, %v1413
      %v1415 = vpop.f32.mrf.mxu0
      %1416 = vmatprep.mubr.f32.mxu0 0.0
      %1417 = vmatmul.mubr.f32.gmra.mxu0 %v652
      %v1418 = vpop.f32.mrf.mxu0
      %v1419 = vadd.f32 %v1034, %v1418
      %v1420 = vpop.f32.mrf.mxu0
      %1421 = vmatprep.mubr.f32.mxu0 0.0
      %1422 = vmatmul.mubr.f32.gmra.mxu0 %v655
      %v1423 = vpop.f32.mrf.mxu0
      %v1424 = vadd.f32 %v1039, %v1423
      %v1425 = vpop.f32.mrf.mxu0
      %1426 = vmatprep.mubr.f32.mxu0 0.0
      %1427 = vmatmul.mubr.f32.gmra.mxu0 %v658
      %v1428 = vpop.f32.mrf.mxu0
      %v1429 = vadd.f32 %v1044, %v1428
      %v1430 = vpop.f32.mrf.mxu0
      %1431 = vmatprep.mubr.f32.mxu0 0.0
      %1432 = vmatmul.mubr.f32.gmra.mxu0 %v661
      %v1433 = vpop.f32.mrf.mxu0
      %v1434 = vadd.f32 %v1049, %v1433
      %v1435 = vpop.f32.mrf.mxu0
      %1436 = vdwg.mxu0
      %v1437 = vld [vmem:[%s3] sm:$0xff]
      %v1438 = vld [vmem:[%s3 + $0x8] sm:$0xff]
      %v1439 = vld [vmem:[%s3 + $0x10] sm:$0xff]
      %v1440 = vld [vmem:[%s3 + $0x18] sm:$0xff]
      %v1441 = vld [vmem:[%s3 + $0x20] sm:$0xff]
      %v1442 = vld [vmem:[%s3 + $0x28] sm:$0xff]
      %v1443 = vld [vmem:[%s3 + $0x30] sm:$0xff]
      %v1444 = vld [vmem:[%s3 + $0x38] sm:$0xff]
      %v1445 = vld [vmem:[%s3 + $0x40] sm:$0xff]
      %v1446 = vld [vmem:[%s3 + $0x48] sm:$0xff]
      %v1447 = vld [vmem:[%s3 + $0x50] sm:$0xff]
      %v1448 = vld [vmem:[%s3 + $0x58] sm:$0xff]
      %v1449 = vld [vmem:[%s3 + $0x60] sm:$0xff]
      %v1450 = vld [vmem:[%s3 + $0x68] sm:$0xff]
      %v1451 = vld [vmem:[%s3 + $0x70] sm:$0xff]
      %v1452 = vld [vmem:[%s3 + $0x78] sm:$0xff]
      %v1453 = vld [vmem:[%s3 + $0x80] sm:$0xff]
      %v1454 = vld [vmem:[%s3 + $0x88] sm:$0xff]
      %v1455 = vld [vmem:[%s3 + $0x90] sm:$0xff]
      %v1456 = vld [vmem:[%s3 + $0x98] sm:$0xff]
      %v1457 = vld [vmem:[%s3 + $0xa0] sm:$0xff]
      %v1458 = vld [vmem:[%s3 + $0xa8] sm:$0xff]
      %v1459 = vld [vmem:[%s3 + $0xb0] sm:$0xff]
      %v1460 = vld [vmem:[%s3 + $0xb8] sm:$0xff]
      %v1461 = vld [vmem:[%s4] sm:$0x7]
      %v1463 = vlaneseq
      %v1464 = vshrl.u32 %v1463, 7
      %v1465 = vsub.s32 0, %v1464
      %v1466 = vrot.slane %v1461, %v1465
      %v1467 = vlaneseq
      %v1468 = vshrl.u32 %v1467, 7
      %v1469 = vsub.s32 1, %v1468
      %v1470 = vrot.slane %v1461, %v1469
      %v1471 = vlaneseq
      %v1472 = vshrl.u32 %v1471, 7
      %v1473 = vsub.s32 2, %v1472
      %v1474 = vrot.slane %v1461, %v1473
      %vm1478 = vcmask 523264
      %v1480 = vsel %vm1478, %v1119, 0
      %v1483 = vsel %vm1478, %v1124, 0
      %v1486 = vsel %vm1478, %v1129, 0
      %v1489 = vsel %vm1478, %v1134, 0
      %v1492 = vsel %vm1478, %v1139, 0
      %v1495 = vsel %vm1478, %v1144, 0
      %v1498 = vsel %vm1478, %v1149, 0
      %v1501 = vsel %vm1478, %v1154, 0
      %v1504 = vsel %vm1478, %v1159, 0
      %v1507 = vsel %vm1478, %v1164, 0
      %v1510 = vsel %vm1478, %v1169, 0
      %v1513 = vsel %vm1478, %v1174, 0
      %v1516 = vsel %vm1478, %v1179, 0
      %v1519 = vsel %vm1478, %v1184, 0
      %v1522 = vsel %vm1478, %v1189, 0
      %v1525 = vsel %vm1478, %v1194, 0
      %v1528 = vsel %vm1478, %v1199, 0
      %v1531 = vsel %vm1478, %v1204, 0
      %v1534 = vsel %vm1478, %v1209, 0
      %v1537 = vsel %vm1478, %v1214, 0
      %v1540 = vsel %vm1478, %v1219, 0
      %v1543 = vsel %vm1478, %v1224, 0
      %v1546 = vsel %vm1478, %v1229, 0
      %v1549 = vsel %vm1478, %v1234, 0
      %v1552 = vsel %vm1478, %v1239, 0
      %v1555 = vsel %vm1478, %v1244, 0
      %v1558 = vsel %vm1478, %v1249, 0
      %v1561 = vsel %vm1478, %v1254, 0
      %v1564 = vsel %vm1478, %v1259, 0
      %v1567 = vsel %vm1478, %v1264, 0
      %v1570 = vsel %vm1478, %v1269, 0
      %v1573 = vsel %vm1478, %v1274, 0
      %v1576 = vsel %vm1478, %v1279, 0
      %v1579 = vsel %vm1478, %v1284, 0
      %v1582 = vsel %vm1478, %v1289, 0
      %v1585 = vsel %vm1478, %v1294, 0
      %v1588 = vsel %vm1478, %v1299, 0
      %v1591 = vsel %vm1478, %v1304, 0
      %v1594 = vsel %vm1478, %v1309, 0
      %v1597 = vsel %vm1478, %v1314, 0
      %v1600 = vsel %vm1478, %v1319, 0
      %v1603 = vsel %vm1478, %v1324, 0
      %v1606 = vsel %vm1478, %v1329, 0
      %v1609 = vsel %vm1478, %v1334, 0
      %v1612 = vsel %vm1478, %v1339, 0
      %v1615 = vsel %vm1478, %v1344, 0
      %v1618 = vsel %vm1478, %v1349, 0
      %v1621 = vsel %vm1478, %v1354, 0
      %v1624 = vsel %vm1478, %v1359, 0
      %v1627 = vsel %vm1478, %v1364, 0
      %v1630 = vsel %vm1478, %v1369, 0
      %v1633 = vsel %vm1478, %v1374, 0
      %v1636 = vsel %vm1478, %v1379, 0
      %v1639 = vsel %vm1478, %v1384, 0
      %v1642 = vsel %vm1478, %v1389, 0
      %v1645 = vsel %vm1478, %v1394, 0
      %v1648 = vsel %vm1478, %v1399, 0
      %v1651 = vsel %vm1478, %v1404, 0
      %v1654 = vsel %vm1478, %v1409, 0
      %v1657 = vsel %vm1478, %v1414, 0
      %v1660 = vsel %vm1478, %v1419, 0
      %v1663 = vsel %vm1478, %v1424, 0
      %v1666 = vsel %vm1478, %v1429, 0
      %v1669 = vsel %vm1478, %v1434, 0
      %1671 = vmatprep.subr.mxu0 0.0
      %1672 = vmatpush1.msra.mxu0 0.0
      %1673 = vmatprep.subr.mxu0 0.0
      %1674 = vmatpush1.msra.mxu0 0.0
      %1675 = vmatprep.subr.mxu0 0.0
      %1676 = vmatpush1.msra.mxu0 0.0
      %1677 = vmatprep.subr.mxu0 0.0
      %1678 = vmatpush1.msra.mxu0 0.0
      %1679 = vmatprep.subr.mxu0 0.0
      %1680 = vmatpush1.msra.mxu0 0.0
      %1681 = vmatprep.subr.mxu0 0.0
      %1682 = vmatpush1.msra.mxu0 0.0
      %1683 = vmatprep.subr.mxu0 0.0
      %1684 = vmatpush1.msra.mxu0 0.0
      %1685 = vmatprep.subr.mxu0 0.0
      %1686 = vmatpush1.msra.mxu0 0.0
      %1687 = vmatprep.subr.mxu0 %v1459
      %1688 = vmatpush1.msra.mxu0 %v1458
      %1689 = vmatprep.subr.mxu0 %v1456
      %1690 = vmatpush1.msra.mxu0 %v1455
      %1691 = vmatprep.subr.mxu0 %v1453
      %1692 = vmatpush1.msra.mxu0 %v1452
      %1693 = vmatprep.subr.mxu0 %v1450
      %1694 = vmatpush1.msra.mxu0 %v1449
      %1695 = vmatprep.subr.mxu0 %v1447
      %1696 = vmatpush1.msra.mxu0 %v1446
      %1697 = vmatprep.subr.mxu0 %v1444
      %1698 = vmatpush1.msra.mxu0 %v1443
      %1699 = vmatprep.subr.mxu0 %v1441
      %1700 = vmatpush1.msra.mxu0 %v1440
      %1701 = vmatprep.subr.mxu0 %v1438
      %1702 = vmatpush1.msra.mxu0 %v1437
      %1703 = vmatprep.subr.mxu0 0.0
      %1704 = vmatpush2.msra.mxu0 0.0
      %1705 = vmatprep.subr.mxu0 0.0
      %1706 = vmatpush2.msra.mxu0 0.0
      %1707 = vmatprep.subr.mxu0 0.0
      %1708 = vmatpush2.msra.mxu0 0.0
      %1709 = vmatprep.subr.mxu0 0.0
      %1710 = vmatpush2.msra.mxu0 0.0
      %1711 = vmatprep.subr.mxu0 0.0
      %1712 = vmatpush2.msra.mxu0 0.0
      %1713 = vmatprep.subr.mxu0 0.0
      %1714 = vmatpush2.msra.mxu0 0.0
      %1715 = vmatprep.subr.mxu0 0.0
      %1716 = vmatpush2.msra.mxu0 0.0
      %1717 = vmatprep.subr.mxu0 0.0
      %1718 = vmatpush2.msra.mxu0 0.0
      %1719 = vmatprep.subr.mxu0 0.0
      %1720 = vmatpush2.msra.mxu0 0.0
      %1721 = vmatprep.subr.mxu0 0.0
      %1722 = vmatpush2.msra.mxu0 0.0
      %1723 = vmatprep.subr.mxu0 0.0
      %1724 = vmatpush2.msra.mxu0 0.0
      %1725 = vmatprep.subr.mxu0 0.0
      %1726 = vmatpush2.msra.mxu0 0.0
      %1727 = vmatprep.subr.mxu0 0.0
      %1728 = vmatpush2.msra.mxu0 0.0
      %1729 = vmatprep.subr.mxu0 0.0
      %1730 = vmatpush2.msra.mxu0 0.0
      %1731 = vmatprep.subr.mxu0 0.0
      %1732 = vmatpush2.msra.mxu0 0.0
      %1733 = vmatprep.subr.mxu0 0.0
      %1734 = vmatpush2.msra.mxu0 0.0
      %1735 = vmatprep.mubr.f32.mxu0 0.0
      %1736 = vmatmul.mubr.f32.gmra.mxu0 %v1480
      %v1737 = vpop.f32.mrf.mxu0
      %v1738 = vadd.f32 %v1466, %v1737
      %v1739 = vpop.f32.mrf.mxu0
      %v1740 = vadd.f32 %v1470, %v1739
      %1741 = vmatprep.mubr.f32.mxu0 0.0
      %1742 = vmatmul.mubr.f32.gmra.mxu0 %v1483
      %v1743 = vpop.f32.mrf.mxu0
      %v1744 = vadd.f32 %v1466, %v1743
      %v1745 = vpop.f32.mrf.mxu0
      %v1746 = vadd.f32 %v1470, %v1745
      %1747 = vmatprep.mubr.f32.mxu0 0.0
      %1748 = vmatmul.mubr.f32.gmra.mxu0 %v1486
      %v1749 = vpop.f32.mrf.mxu0
      %v1750 = vadd.f32 %v1466, %v1749
      %v1751 = vpop.f32.mrf.mxu0
      %v1752 = vadd.f32 %v1470, %v1751
      %1753 = vmatprep.mubr.f32.mxu0 0.0
      %1754 = vmatmul.mubr.f32.gmra.mxu0 %v1489
      %v1755 = vpop.f32.mrf.mxu0
      %v1756 = vadd.f32 %v1466, %v1755
      %v1757 = vpop.f32.mrf.mxu0
      %v1758 = vadd.f32 %v1470, %v1757
      %1759 = vmatprep.mubr.f32.mxu0 0.0
      %1760 = vmatmul.mubr.f32.gmra.mxu0 %v1492
      %v1761 = vpop.f32.mrf.mxu0
      %v1762 = vadd.f32 %v1466, %v1761
      %v1763 = vpop.f32.mrf.mxu0
      %v1764 = vadd.f32 %v1470, %v1763
      %1765 = vmatprep.mubr.f32.mxu0 0.0
      %1766 = vmatmul.mubr.f32.gmra.mxu0 %v1495
      %v1767 = vpop.f32.mrf.mxu0
      %v1768 = vadd.f32 %v1466, %v1767
      %v1769 = vpop.f32.mrf.mxu0
      %v1770 = vadd.f32 %v1470, %v1769
      %1771 = vmatprep.mubr.f32.mxu0 0.0
      %1772 = vmatmul.mubr.f32.gmra.mxu0 %v1498
      %v1773 = vpop.f32.mrf.mxu0
      %v1774 = vadd.f32 %v1466, %v1773
      %v1775 = vpop.f32.mrf.mxu0
      %v1776 = vadd.f32 %v1470, %v1775
      %1777 = vmatprep.mubr.f32.mxu0 0.0
      %1778 = vmatmul.mubr.f32.gmra.mxu0 %v1501
      %v1779 = vpop.f32.mrf.mxu0
      %v1780 = vadd.f32 %v1466, %v1779
      %v1781 = vpop.f32.mrf.mxu0
      %v1782 = vadd.f32 %v1470, %v1781
      %1783 = vmatprep.mubr.f32.mxu0 0.0
      %1784 = vmatmul.mubr.f32.gmra.mxu0 %v1504
      %v1785 = vpop.f32.mrf.mxu0
      %v1786 = vadd.f32 %v1466, %v1785
      %v1787 = vpop.f32.mrf.mxu0
      %v1788 = vadd.f32 %v1470, %v1787
      %1789 = vmatprep.mubr.f32.mxu0 0.0
      %1790 = vmatmul.mubr.f32.gmra.mxu0 %v1507
      %v1791 = vpop.f32.mrf.mxu0
      %v1792 = vadd.f32 %v1466, %v1791
      %v1793 = vpop.f32.mrf.mxu0
      %v1794 = vadd.f32 %v1470, %v1793
      %1795 = vmatprep.mubr.f32.mxu0 0.0
      %1796 = vmatmul.mubr.f32.gmra.mxu0 %v1510
      %v1797 = vpop.f32.mrf.mxu0
      %v1798 = vadd.f32 %v1466, %v1797
      %v1799 = vpop.f32.mrf.mxu0
      %v1800 = vadd.f32 %v1470, %v1799
      %1801 = vmatprep.mubr.f32.mxu0 0.0
      %1802 = vmatmul.mubr.f32.gmra.mxu0 %v1513
      %v1803 = vpop.f32.mrf.mxu0
      %v1804 = vadd.f32 %v1466, %v1803
      %v1805 = vpop.f32.mrf.mxu0
      %v1806 = vadd.f32 %v1470, %v1805
      %1807 = vmatprep.mubr.f32.mxu0 0.0
      %1808 = vmatmul.mubr.f32.gmra.mxu0 %v1516
      %v1809 = vpop.f32.mrf.mxu0
      %v1810 = vadd.f32 %v1466, %v1809
      %v1811 = vpop.f32.mrf.mxu0
      %v1812 = vadd.f32 %v1470, %v1811
      %1813 = vmatprep.mubr.f32.mxu0 0.0
      %1814 = vmatmul.mubr.f32.gmra.mxu0 %v1519
      %v1815 = vpop.f32.mrf.mxu0
      %v1816 = vadd.f32 %v1466, %v1815
      %v1817 = vpop.f32.mrf.mxu0
      %v1818 = vadd.f32 %v1470, %v1817
      %1819 = vmatprep.mubr.f32.mxu0 0.0
      %1820 = vmatmul.mubr.f32.gmra.mxu0 %v1522
      %v1821 = vpop.f32.mrf.mxu0
      %v1822 = vadd.f32 %v1466, %v1821
      %v1823 = vpop.f32.mrf.mxu0
      %v1824 = vadd.f32 %v1470, %v1823
      %1825 = vmatprep.mubr.f32.mxu0 0.0
      %1826 = vmatmul.mubr.f32.gmra.mxu0 %v1525
      %v1827 = vpop.f32.mrf.mxu0
      %v1828 = vadd.f32 %v1466, %v1827
      %v1829 = vpop.f32.mrf.mxu0
      %v1830 = vadd.f32 %v1470, %v1829
      %1831 = vmatprep.mubr.f32.mxu0 0.0
      %1832 = vmatmul.mubr.f32.gmra.mxu0 %v1528
      %v1833 = vpop.f32.mrf.mxu0
      %v1834 = vadd.f32 %v1466, %v1833
      %v1835 = vpop.f32.mrf.mxu0
      %v1836 = vadd.f32 %v1470, %v1835
      %1837 = vmatprep.mubr.f32.mxu0 0.0
      %1838 = vmatmul.mubr.f32.gmra.mxu0 %v1531
      %v1839 = vpop.f32.mrf.mxu0
      %v1840 = vadd.f32 %v1466, %v1839
      %v1841 = vpop.f32.mrf.mxu0
      %v1842 = vadd.f32 %v1470, %v1841
      %1843 = vmatprep.mubr.f32.mxu0 0.0
      %1844 = vmatmul.mubr.f32.gmra.mxu0 %v1534
      %v1845 = vpop.f32.mrf.mxu0
      %v1846 = vadd.f32 %v1466, %v1845
      %v1847 = vpop.f32.mrf.mxu0
      %v1848 = vadd.f32 %v1470, %v1847
      %1849 = vmatprep.mubr.f32.mxu0 0.0
      %1850 = vmatmul.mubr.f32.gmra.mxu0 %v1537
      %v1851 = vpop.f32.mrf.mxu0
      %v1852 = vadd.f32 %v1466, %v1851
      %v1853 = vpop.f32.mrf.mxu0
      %v1854 = vadd.f32 %v1470, %v1853
      %1855 = vmatprep.mubr.f32.mxu0 0.0
      %1856 = vmatmul.mubr.f32.gmra.mxu0 %v1540
      %v1857 = vpop.f32.mrf.mxu0
      %v1858 = vadd.f32 %v1466, %v1857
      %v1859 = vpop.f32.mrf.mxu0
      %v1860 = vadd.f32 %v1470, %v1859
      %1861 = vmatprep.mubr.f32.mxu0 0.0
      %1862 = vmatmul.mubr.f32.gmra.mxu0 %v1543
      %v1863 = vpop.f32.mrf.mxu0
      %v1864 = vadd.f32 %v1466, %v1863
      %v1865 = vpop.f32.mrf.mxu0
      %v1866 = vadd.f32 %v1470, %v1865
      %1867 = vmatprep.mubr.f32.mxu0 0.0
      %1868 = vmatmul.mubr.f32.gmra.mxu0 %v1546
      %v1869 = vpop.f32.mrf.mxu0
      %v1870 = vadd.f32 %v1466, %v1869
      %v1871 = vpop.f32.mrf.mxu0
      %v1872 = vadd.f32 %v1470, %v1871
      %1873 = vmatprep.mubr.f32.mxu0 0.0
      %1874 = vmatmul.mubr.f32.gmra.mxu0 %v1549
      %v1875 = vpop.f32.mrf.mxu0
      %v1876 = vadd.f32 %v1466, %v1875
      %v1877 = vpop.f32.mrf.mxu0
      %v1878 = vadd.f32 %v1470, %v1877
      %1879 = vmatprep.mubr.f32.mxu0 0.0
      %1880 = vmatmul.mubr.f32.gmra.mxu0 %v1552
      %v1881 = vpop.f32.mrf.mxu0
      %v1882 = vadd.f32 %v1466, %v1881
      %v1883 = vpop.f32.mrf.mxu0
      %v1884 = vadd.f32 %v1470, %v1883
      %1885 = vmatprep.mubr.f32.mxu0 0.0
      %1886 = vmatmul.mubr.f32.gmra.mxu0 %v1555
      %v1887 = vpop.f32.mrf.mxu0
      %v1888 = vadd.f32 %v1466, %v1887
      %v1889 = vpop.f32.mrf.mxu0
      %v1890 = vadd.f32 %v1470, %v1889
      %1891 = vmatprep.mubr.f32.mxu0 0.0
      %1892 = vmatmul.mubr.f32.gmra.mxu0 %v1558
      %v1893 = vpop.f32.mrf.mxu0
      %v1894 = vadd.f32 %v1466, %v1893
      %v1895 = vpop.f32.mrf.mxu0
      %v1896 = vadd.f32 %v1470, %v1895
      %1897 = vmatprep.mubr.f32.mxu0 0.0
      %1898 = vmatmul.mubr.f32.gmra.mxu0 %v1561
      %v1899 = vpop.f32.mrf.mxu0
      %v1900 = vadd.f32 %v1466, %v1899
      %v1901 = vpop.f32.mrf.mxu0
      %v1902 = vadd.f32 %v1470, %v1901
      %1903 = vmatprep.mubr.f32.mxu0 0.0
      %1904 = vmatmul.mubr.f32.gmra.mxu0 %v1564
      %v1905 = vpop.f32.mrf.mxu0
      %v1906 = vadd.f32 %v1466, %v1905
      %v1907 = vpop.f32.mrf.mxu0
      %v1908 = vadd.f32 %v1470, %v1907
      %1909 = vmatprep.mubr.f32.mxu0 0.0
      %1910 = vmatmul.mubr.f32.gmra.mxu0 %v1567
      %v1911 = vpop.f32.mrf.mxu0
      %v1912 = vadd.f32 %v1466, %v1911
      %v1913 = vpop.f32.mrf.mxu0
      %v1914 = vadd.f32 %v1470, %v1913
      %1915 = vmatprep.mubr.f32.mxu0 0.0
      %1916 = vmatmul.mubr.f32.gmra.mxu0 %v1570
      %v1917 = vpop.f32.mrf.mxu0
      %v1918 = vadd.f32 %v1466, %v1917
      %v1919 = vpop.f32.mrf.mxu0
      %v1920 = vadd.f32 %v1470, %v1919
      %1921 = vmatprep.mubr.f32.mxu0 0.0
      %1922 = vmatmul.mubr.f32.gmra.mxu0 %v1573
      %v1923 = vpop.f32.mrf.mxu0
      %v1924 = vadd.f32 %v1466, %v1923
      %v1925 = vpop.f32.mrf.mxu0
      %v1926 = vadd.f32 %v1470, %v1925
      %1927 = vmatprep.mubr.f32.mxu0 0.0
      %1928 = vmatmul.mubr.f32.gmra.mxu0 %v1576
      %v1929 = vpop.f32.mrf.mxu0
      %v1930 = vadd.f32 %v1466, %v1929
      %v1931 = vpop.f32.mrf.mxu0
      %v1932 = vadd.f32 %v1470, %v1931
      %1933 = vmatprep.mubr.f32.mxu0 0.0
      %1934 = vmatmul.mubr.f32.gmra.mxu0 %v1579
      %v1935 = vpop.f32.mrf.mxu0
      %v1936 = vadd.f32 %v1466, %v1935
      %v1937 = vpop.f32.mrf.mxu0
      %v1938 = vadd.f32 %v1470, %v1937
      %1939 = vmatprep.mubr.f32.mxu0 0.0
      %1940 = vmatmul.mubr.f32.gmra.mxu0 %v1582
      %v1941 = vpop.f32.mrf.mxu0
      %v1942 = vadd.f32 %v1466, %v1941
      %v1943 = vpop.f32.mrf.mxu0
      %v1944 = vadd.f32 %v1470, %v1943
      %1945 = vmatprep.mubr.f32.mxu0 0.0
      %1946 = vmatmul.mubr.f32.gmra.mxu0 %v1585
      %v1947 = vpop.f32.mrf.mxu0
      %v1948 = vadd.f32 %v1466, %v1947
      %v1949 = vpop.f32.mrf.mxu0
      %v1950 = vadd.f32 %v1470, %v1949
      %1951 = vmatprep.mubr.f32.mxu0 0.0
      %1952 = vmatmul.mubr.f32.gmra.mxu0 %v1588
      %v1953 = vpop.f32.mrf.mxu0
      %v1954 = vadd.f32 %v1466, %v1953
      %v1955 = vpop.f32.mrf.mxu0
      %v1956 = vadd.f32 %v1470, %v1955
      %1957 = vmatprep.mubr.f32.mxu0 0.0
      %1958 = vmatmul.mubr.f32.gmra.mxu0 %v1591
      %v1959 = vpop.f32.mrf.mxu0
      %v1960 = vadd.f32 %v1466, %v1959
      %v1961 = vpop.f32.mrf.mxu0
      %v1962 = vadd.f32 %v1470, %v1961
      %1963 = vmatprep.mubr.f32.mxu0 0.0
      %1964 = vmatmul.mubr.f32.gmra.mxu0 %v1594
      %v1965 = vpop.f32.mrf.mxu0
      %v1966 = vadd.f32 %v1466, %v1965
      %v1967 = vpop.f32.mrf.mxu0
      %v1968 = vadd.f32 %v1470, %v1967
      %1969 = vmatprep.mubr.f32.mxu0 0.0
      %1970 = vmatmul.mubr.f32.gmra.mxu0 %v1597
      %v1971 = vpop.f32.mrf.mxu0
      %v1972 = vadd.f32 %v1466, %v1971
      %v1973 = vpop.f32.mrf.mxu0
      %v1974 = vadd.f32 %v1470, %v1973
      %1975 = vmatprep.mubr.f32.mxu0 0.0
      %1976 = vmatmul.mubr.f32.gmra.mxu0 %v1600
      %v1977 = vpop.f32.mrf.mxu0
      %v1978 = vadd.f32 %v1466, %v1977
      %v1979 = vpop.f32.mrf.mxu0
      %v1980 = vadd.f32 %v1470, %v1979
      %1981 = vmatprep.mubr.f32.mxu0 0.0
      %1982 = vmatmul.mubr.f32.gmra.mxu0 %v1603
      %v1983 = vpop.f32.mrf.mxu0
      %v1984 = vadd.f32 %v1466, %v1983
      %v1985 = vpop.f32.mrf.mxu0
      %v1986 = vadd.f32 %v1470, %v1985
      %1987 = vmatprep.mubr.f32.mxu0 0.0
      %1988 = vmatmul.mubr.f32.gmra.mxu0 %v1606
      %v1989 = vpop.f32.mrf.mxu0
      %v1990 = vadd.f32 %v1466, %v1989
      %v1991 = vpop.f32.mrf.mxu0
      %v1992 = vadd.f32 %v1470, %v1991
      %1993 = vmatprep.mubr.f32.mxu0 0.0
      %1994 = vmatmul.mubr.f32.gmra.mxu0 %v1609
      %v1995 = vpop.f32.mrf.mxu0
      %v1996 = vadd.f32 %v1466, %v1995
      %v1997 = vpop.f32.mrf.mxu0
      %v1998 = vadd.f32 %v1470, %v1997
      %1999 = vmatprep.mubr.f32.mxu0 0.0
      %2000 = vmatmul.mubr.f32.gmra.mxu0 %v1612
      %v2001 = vpop.f32.mrf.mxu0
      %v2002 = vadd.f32 %v1466, %v2001
      %v2003 = vpop.f32.mrf.mxu0
      %v2004 = vadd.f32 %v1470, %v2003
      %2005 = vmatprep.mubr.f32.mxu0 0.0
      %2006 = vmatmul.mubr.f32.gmra.mxu0 %v1615
      %v2007 = vpop.f32.mrf.mxu0
      %v2008 = vadd.f32 %v1466, %v2007
      %v2009 = vpop.f32.mrf.mxu0
      %v2010 = vadd.f32 %v1470, %v2009
      %2011 = vmatprep.mubr.f32.mxu0 0.0
      %2012 = vmatmul.mubr.f32.gmra.mxu0 %v1618
      %v2013 = vpop.f32.mrf.mxu0
      %v2014 = vadd.f32 %v1466, %v2013
      %v2015 = vpop.f32.mrf.mxu0
      %v2016 = vadd.f32 %v1470, %v2015
      %2017 = vmatprep.mubr.f32.mxu0 0.0
      %2018 = vmatmul.mubr.f32.gmra.mxu0 %v1621
      %v2019 = vpop.f32.mrf.mxu0
      %v2020 = vadd.f32 %v1466, %v2019
      %v2021 = vpop.f32.mrf.mxu0
      %v2022 = vadd.f32 %v1470, %v2021
      %2023 = vmatprep.mubr.f32.mxu0 0.0
      %2024 = vmatmul.mubr.f32.gmra.mxu0 %v1624
      %v2025 = vpop.f32.mrf.mxu0
      %v2026 = vadd.f32 %v1466, %v2025
      %v2027 = vpop.f32.mrf.mxu0
      %v2028 = vadd.f32 %v1470, %v2027
      %2029 = vmatprep.mubr.f32.mxu0 0.0
      %2030 = vmatmul.mubr.f32.gmra.mxu0 %v1627
      %v2031 = vpop.f32.mrf.mxu0
      %v2032 = vadd.f32 %v1466, %v2031
      %v2033 = vpop.f32.mrf.mxu0
      %v2034 = vadd.f32 %v1470, %v2033
      %2035 = vmatprep.mubr.f32.mxu0 0.0
      %2036 = vmatmul.mubr.f32.gmra.mxu0 %v1630
      %v2037 = vpop.f32.mrf.mxu0
      %v2038 = vadd.f32 %v1466, %v2037
      %v2039 = vpop.f32.mrf.mxu0
      %v2040 = vadd.f32 %v1470, %v2039
      %2041 = vmatprep.mubr.f32.mxu0 0.0
      %2042 = vmatmul.mubr.f32.gmra.mxu0 %v1633
      %v2043 = vpop.f32.mrf.mxu0
      %v2044 = vadd.f32 %v1466, %v2043
      %v2045 = vpop.f32.mrf.mxu0
      %v2046 = vadd.f32 %v1470, %v2045
      %2047 = vmatprep.mubr.f32.mxu0 0.0
      %2048 = vmatmul.mubr.f32.gmra.mxu0 %v1636
      %v2049 = vpop.f32.mrf.mxu0
      %v2050 = vadd.f32 %v1466, %v2049
      %v2051 = vpop.f32.mrf.mxu0
      %v2052 = vadd.f32 %v1470, %v2051
      %2053 = vmatprep.mubr.f32.mxu0 0.0
      %2054 = vmatmul.mubr.f32.gmra.mxu0 %v1639
      %v2055 = vpop.f32.mrf.mxu0
      %v2056 = vadd.f32 %v1466, %v2055
      %v2057 = vpop.f32.mrf.mxu0
      %v2058 = vadd.f32 %v1470, %v2057
      %2059 = vmatprep.mubr.f32.mxu0 0.0
      %2060 = vmatmul.mubr.f32.gmra.mxu0 %v1642
      %v2061 = vpop.f32.mrf.mxu0
      %v2062 = vadd.f32 %v1466, %v2061
      %v2063 = vpop.f32.mrf.mxu0
      %v2064 = vadd.f32 %v1470, %v2063
      %2065 = vmatprep.mubr.f32.mxu0 0.0
      %2066 = vmatmul.mubr.f32.gmra.mxu0 %v1645
      %v2067 = vpop.f32.mrf.mxu0
      %v2068 = vadd.f32 %v1466, %v2067
      %v2069 = vpop.f32.mrf.mxu0
      %v2070 = vadd.f32 %v1470, %v2069
      %2071 = vmatprep.mubr.f32.mxu0 0.0
      %2072 = vmatmul.mubr.f32.gmra.mxu0 %v1648
      %v2073 = vpop.f32.mrf.mxu0
      %v2074 = vadd.f32 %v1466, %v2073
      %v2075 = vpop.f32.mrf.mxu0
      %v2076 = vadd.f32 %v1470, %v2075
      %2077 = vmatprep.mubr.f32.mxu0 0.0
      %2078 = vmatmul.mubr.f32.gmra.mxu0 %v1651
      %v2079 = vpop.f32.mrf.mxu0
      %v2080 = vadd.f32 %v1466, %v2079
      %v2081 = vpop.f32.mrf.mxu0
      %v2082 = vadd.f32 %v1470, %v2081
      %2083 = vmatprep.mubr.f32.mxu0 0.0
      %2084 = vmatmul.mubr.f32.gmra.mxu0 %v1654
      %v2085 = vpop.f32.mrf.mxu0
      %v2086 = vadd.f32 %v1466, %v2085
      %v2087 = vpop.f32.mrf.mxu0
      %v2088 = vadd.f32 %v1470, %v2087
      %2089 = vmatprep.mubr.f32.mxu0 0.0
      %2090 = vmatmul.mubr.f32.gmra.mxu0 %v1657
      %v2091 = vpop.f32.mrf.mxu0
      %v2092 = vadd.f32 %v1466, %v2091
      %v2093 = vpop.f32.mrf.mxu0
      %v2094 = vadd.f32 %v1470, %v2093
      %2095 = vmatprep.mubr.f32.mxu0 0.0
      %2096 = vmatmul.mubr.f32.gmra.mxu0 %v1660
      %v2097 = vpop.f32.mrf.mxu0
      %v2098 = vadd.f32 %v1466, %v2097
      %v2099 = vpop.f32.mrf.mxu0
      %v2100 = vadd.f32 %v1470, %v2099
      %2101 = vmatprep.mubr.f32.mxu0 0.0
      %2102 = vmatmul.mubr.f32.gmra.mxu0 %v1663
      %v2103 = vpop.f32.mrf.mxu0
      %v2104 = vadd.f32 %v1466, %v2103
      %v2105 = vpop.f32.mrf.mxu0
      %v2106 = vadd.f32 %v1470, %v2105
      %2107 = vmatprep.mubr.f32.mxu0 0.0
      %2108 = vmatmul.mubr.f32.gmra.mxu0 %v1666
      %v2109 = vpop.f32.mrf.mxu0
      %v2110 = vadd.f32 %v1466, %v2109
      %v2111 = vpop.f32.mrf.mxu0
      %v2112 = vadd.f32 %v1470, %v2111
      %2113 = vmatprep.mubr.f32.mxu0 0.0
      %2114 = vmatmul.mubr.f32.gmra.mxu0 %v1669
      %v2115 = vpop.f32.mrf.mxu0
      %v2116 = vadd.f32 %v1466, %v2115
      %v2117 = vpop.f32.mrf.mxu0
      %v2118 = vadd.f32 %v1470, %v2117
      %2119 = vdwg.mxu0
      %2120 = vmatprep.subr.mxu0 0.0
      %2121 = vmatpush1.msra.mxu0 0.0
      %2122 = vmatprep.subr.mxu0 0.0
      %2123 = vmatpush1.msra.mxu0 0.0
      %2124 = vmatprep.subr.mxu0 0.0
      %2125 = vmatpush1.msra.mxu0 0.0
      %2126 = vmatprep.subr.mxu0 0.0
      %2127 = vmatpush1.msra.mxu0 0.0
      %2128 = vmatprep.subr.mxu0 0.0
      %2129 = vmatpush1.msra.mxu0 0.0
      %2130 = vmatprep.subr.mxu0 0.0
      %2131 = vmatpush1.msra.mxu0 0.0
      %2132 = vmatprep.subr.mxu0 0.0
      %2133 = vmatpush1.msra.mxu0 0.0
      %2134 = vmatprep.subr.mxu0 0.0
      %2135 = vmatpush1.msra.mxu0 0.0
      %2136 = vmatprep.subr.mxu0 0.0
      %2137 = vmatpush1.msra.mxu0 %v1460
      %2138 = vmatprep.subr.mxu0 0.0
      %2139 = vmatpush1.msra.mxu0 %v1457
      %2140 = vmatprep.subr.mxu0 0.0
      %2141 = vmatpush1.msra.mxu0 %v1454
      %2142 = vmatprep.subr.mxu0 0.0
      %2143 = vmatpush1.msra.mxu0 %v1451
      %2144 = vmatprep.subr.mxu0 0.0
      %2145 = vmatpush1.msra.mxu0 %v1448
      %2146 = vmatprep.subr.mxu0 0.0
      %2147 = vmatpush1.msra.mxu0 %v1445
      %2148 = vmatprep.subr.mxu0 0.0
      %2149 = vmatpush1.msra.mxu0 %v1442
      %2150 = vmatprep.subr.mxu0 0.0
      %2151 = vmatpush1.msra.mxu0 %v1439
      %2152 = vmatprep.subr.mxu0 0.0
      %2153 = vmatpush2.msra.mxu0 0.0
      %2154 = vmatprep.subr.mxu0 0.0
      %2155 = vmatpush2.msra.mxu0 0.0
      %2156 = vmatprep.subr.mxu0 0.0
      %2157 = vmatpush2.msra.mxu0 0.0
      %2158 = vmatprep.subr.mxu0 0.0
      %2159 = vmatpush2.msra.mxu0 0.0
      %2160 = vmatprep.subr.mxu0 0.0
      %2161 = vmatpush2.msra.mxu0 0.0
      %2162 = vmatprep.subr.mxu0 0.0
      %2163 = vmatpush2.msra.mxu0 0.0
      %2164 = vmatprep.subr.mxu0 0.0
      %2165 = vmatpush2.msra.mxu0 0.0
      %2166 = vmatprep.subr.mxu0 0.0
      %2167 = vmatpush2.msra.mxu0 0.0
      %2168 = vmatprep.subr.mxu0 0.0
      %2169 = vmatpush2.msra.mxu0 0.0
      %2170 = vmatprep.subr.mxu0 0.0
      %2171 = vmatpush2.msra.mxu0 0.0
      %2172 = vmatprep.subr.mxu0 0.0
      %2173 = vmatpush2.msra.mxu0 0.0
      %2174 = vmatprep.subr.mxu0 0.0
      %2175 = vmatpush2.msra.mxu0 0.0
      %2176 = vmatprep.subr.mxu0 0.0
      %2177 = vmatpush2.msra.mxu0 0.0
      %2178 = vmatprep.subr.mxu0 0.0
      %2179 = vmatpush2.msra.mxu0 0.0
      %2180 = vmatprep.subr.mxu0 0.0
      %2181 = vmatpush2.msra.mxu0 0.0
      %2182 = vmatprep.subr.mxu0 0.0
      %2183 = vmatpush2.msra.mxu0 0.0
      %2184 = vmatprep.mubr.f32.mxu0 0.0
      %2185 = vmatmul.mubr.f32.gmra.mxu0 %v1480
      %v2186 = vpop.f32.mrf.mxu0
      %v2187 = vadd.f32 %v1474, %v2186
      %v2188 = vpop.f32.mrf.mxu0
      %2189 = vmatprep.mubr.f32.mxu0 0.0
      %2190 = vmatmul.mubr.f32.gmra.mxu0 %v1483
      %v2191 = vpop.f32.mrf.mxu0
      %v2192 = vadd.f32 %v1474, %v2191
      %v2193 = vpop.f32.mrf.mxu0
      %2194 = vmatprep.mubr.f32.mxu0 0.0
      %2195 = vmatmul.mubr.f32.gmra.mxu0 %v1486
      %v2196 = vpop.f32.mrf.mxu0
      %v2197 = vadd.f32 %v1474, %v2196
      %v2198 = vpop.f32.mrf.mxu0
      %2199 = vmatprep.mubr.f32.mxu0 0.0
      %2200 = vmatmul.mubr.f32.gmra.mxu0 %v1489
      %v2201 = vpop.f32.mrf.mxu0
      %v2202 = vadd.f32 %v1474, %v2201
      %v2203 = vpop.f32.mrf.mxu0
      %2204 = vmatprep.mubr.f32.mxu0 0.0
      %2205 = vmatmul.mubr.f32.gmra.mxu0 %v1492
      %v2206 = vpop.f32.mrf.mxu0
      %v2207 = vadd.f32 %v1474, %v2206
      %v2208 = vpop.f32.mrf.mxu0
      %2209 = vmatprep.mubr.f32.mxu0 0.0
      %2210 = vmatmul.mubr.f32.gmra.mxu0 %v1495
      %v2211 = vpop.f32.mrf.mxu0
      %v2212 = vadd.f32 %v1474, %v2211
      %v2213 = vpop.f32.mrf.mxu0
      %2214 = vmatprep.mubr.f32.mxu0 0.0
      %2215 = vmatmul.mubr.f32.gmra.mxu0 %v1498
      %v2216 = vpop.f32.mrf.mxu0
      %v2217 = vadd.f32 %v1474, %v2216
      %v2218 = vpop.f32.mrf.mxu0
      %2219 = vmatprep.mubr.f32.mxu0 0.0
      %2220 = vmatmul.mubr.f32.gmra.mxu0 %v1501
      %v2221 = vpop.f32.mrf.mxu0
      %v2222 = vadd.f32 %v1474, %v2221
      %v2223 = vpop.f32.mrf.mxu0
      %2224 = vmatprep.mubr.f32.mxu0 0.0
      %2225 = vmatmul.mubr.f32.gmra.mxu0 %v1504
      %v2226 = vpop.f32.mrf.mxu0
      %v2227 = vadd.f32 %v1474, %v2226
      %v2228 = vpop.f32.mrf.mxu0
      %2229 = vmatprep.mubr.f32.mxu0 0.0
      %2230 = vmatmul.mubr.f32.gmra.mxu0 %v1507
      %v2231 = vpop.f32.mrf.mxu0
      %v2232 = vadd.f32 %v1474, %v2231
      %v2233 = vpop.f32.mrf.mxu0
      %2234 = vmatprep.mubr.f32.mxu0 0.0
      %2235 = vmatmul.mubr.f32.gmra.mxu0 %v1510
      %v2236 = vpop.f32.mrf.mxu0
      %v2237 = vadd.f32 %v1474, %v2236
      %v2238 = vpop.f32.mrf.mxu0
      %2239 = vmatprep.mubr.f32.mxu0 0.0
      %2240 = vmatmul.mubr.f32.gmra.mxu0 %v1513
      %v2241 = vpop.f32.mrf.mxu0
      %v2242 = vadd.f32 %v1474, %v2241
      %v2243 = vpop.f32.mrf.mxu0
      %2244 = vmatprep.mubr.f32.mxu0 0.0
      %2245 = vmatmul.mubr.f32.gmra.mxu0 %v1516
      %v2246 = vpop.f32.mrf.mxu0
      %v2247 = vadd.f32 %v1474, %v2246
      %v2248 = vpop.f32.mrf.mxu0
      %2249 = vmatprep.mubr.f32.mxu0 0.0
      %2250 = vmatmul.mubr.f32.gmra.mxu0 %v1519
      %v2251 = vpop.f32.mrf.mxu0
      %v2252 = vadd.f32 %v1474, %v2251
      %v2253 = vpop.f32.mrf.mxu0
      %2254 = vmatprep.mubr.f32.mxu0 0.0
      %2255 = vmatmul.mubr.f32.gmra.mxu0 %v1522
      %v2256 = vpop.f32.mrf.mxu0
      %v2257 = vadd.f32 %v1474, %v2256
      %v2258 = vpop.f32.mrf.mxu0
      %2259 = vmatprep.mubr.f32.mxu0 0.0
      %2260 = vmatmul.mubr.f32.gmra.mxu0 %v1525
      %v2261 = vpop.f32.mrf.mxu0
      %v2262 = vadd.f32 %v1474, %v2261
      %v2263 = vpop.f32.mrf.mxu0
      %2264 = vmatprep.mubr.f32.mxu0 0.0
      %2265 = vmatmul.mubr.f32.gmra.mxu0 %v1528
      %v2266 = vpop.f32.mrf.mxu0
      %v2267 = vadd.f32 %v1474, %v2266
      %v2268 = vpop.f32.mrf.mxu0
      %2269 = vmatprep.mubr.f32.mxu0 0.0
      %2270 = vmatmul.mubr.f32.gmra.mxu0 %v1531
      %v2271 = vpop.f32.mrf.mxu0
      %v2272 = vadd.f32 %v1474, %v2271
      %v2273 = vpop.f32.mrf.mxu0
      %2274 = vmatprep.mubr.f32.mxu0 0.0
      %2275 = vmatmul.mubr.f32.gmra.mxu0 %v1534
      %v2276 = vpop.f32.mrf.mxu0
      %v2277 = vadd.f32 %v1474, %v2276
      %v2278 = vpop.f32.mrf.mxu0
      %2279 = vmatprep.mubr.f32.mxu0 0.0
      %2280 = vmatmul.mubr.f32.gmra.mxu0 %v1537
      %v2281 = vpop.f32.mrf.mxu0
      %v2282 = vadd.f32 %v1474, %v2281
      %v2283 = vpop.f32.mrf.mxu0
      %2284 = vmatprep.mubr.f32.mxu0 0.0
      %2285 = vmatmul.mubr.f32.gmra.mxu0 %v1540
      %v2286 = vpop.f32.mrf.mxu0
      %v2287 = vadd.f32 %v1474, %v2286
      %v2288 = vpop.f32.mrf.mxu0
      %2289 = vmatprep.mubr.f32.mxu0 0.0
      %2290 = vmatmul.mubr.f32.gmra.mxu0 %v1543
      %v2291 = vpop.f32.mrf.mxu0
      %v2292 = vadd.f32 %v1474, %v2291
      %v2293 = vpop.f32.mrf.mxu0
      %2294 = vmatprep.mubr.f32.mxu0 0.0
      %2295 = vmatmul.mubr.f32.gmra.mxu0 %v1546
      %v2296 = vpop.f32.mrf.mxu0
      %v2297 = vadd.f32 %v1474, %v2296
      %v2298 = vpop.f32.mrf.mxu0
      %2299 = vmatprep.mubr.f32.mxu0 0.0
      %2300 = vmatmul.mubr.f32.gmra.mxu0 %v1549
      %v2301 = vpop.f32.mrf.mxu0
      %v2302 = vadd.f32 %v1474, %v2301
      %v2303 = vpop.f32.mrf.mxu0
      %2304 = vmatprep.mubr.f32.mxu0 0.0
      %2305 = vmatmul.mubr.f32.gmra.mxu0 %v1552
      %v2306 = vpop.f32.mrf.mxu0
      %v2307 = vadd.f32 %v1474, %v2306
      %v2308 = vpop.f32.mrf.mxu0
      %2309 = vmatprep.mubr.f32.mxu0 0.0
      %2310 = vmatmul.mubr.f32.gmra.mxu0 %v1555
      %v2311 = vpop.f32.mrf.mxu0
      %v2312 = vadd.f32 %v1474, %v2311
      %v2313 = vpop.f32.mrf.mxu0
      %2314 = vmatprep.mubr.f32.mxu0 0.0
      %2315 = vmatmul.mubr.f32.gmra.mxu0 %v1558
      %v2316 = vpop.f32.mrf.mxu0
      %v2317 = vadd.f32 %v1474, %v2316
      %v2318 = vpop.f32.mrf.mxu0
      %2319 = vmatprep.mubr.f32.mxu0 0.0
      %2320 = vmatmul.mubr.f32.gmra.mxu0 %v1561
      %v2321 = vpop.f32.mrf.mxu0
      %v2322 = vadd.f32 %v1474, %v2321
      %v2323 = vpop.f32.mrf.mxu0
      %2324 = vmatprep.mubr.f32.mxu0 0.0
      %2325 = vmatmul.mubr.f32.gmra.mxu0 %v1564
      %v2326 = vpop.f32.mrf.mxu0
      %v2327 = vadd.f32 %v1474, %v2326
      %v2328 = vpop.f32.mrf.mxu0
      %2329 = vmatprep.mubr.f32.mxu0 0.0
      %2330 = vmatmul.mubr.f32.gmra.mxu0 %v1567
      %v2331 = vpop.f32.mrf.mxu0
      %v2332 = vadd.f32 %v1474, %v2331
      %v2333 = vpop.f32.mrf.mxu0
      %2334 = vmatprep.mubr.f32.mxu0 0.0
      %2335 = vmatmul.mubr.f32.gmra.mxu0 %v1570
      %v2336 = vpop.f32.mrf.mxu0
      %v2337 = vadd.f32 %v1474, %v2336
      %v2338 = vpop.f32.mrf.mxu0
      %2339 = vmatprep.mubr.f32.mxu0 0.0
      %2340 = vmatmul.mubr.f32.gmra.mxu0 %v1573
      %v2341 = vpop.f32.mrf.mxu0
      %v2342 = vadd.f32 %v1474, %v2341
      %v2343 = vpop.f32.mrf.mxu0
      %2344 = vmatprep.mubr.f32.mxu0 0.0
      %2345 = vmatmul.mubr.f32.gmra.mxu0 %v1576
      %v2346 = vpop.f32.mrf.mxu0
      %v2347 = vadd.f32 %v1474, %v2346
      %v2348 = vpop.f32.mrf.mxu0
      %2349 = vmatprep.mubr.f32.mxu0 0.0
      %2350 = vmatmul.mubr.f32.gmra.mxu0 %v1579
      %v2351 = vpop.f32.mrf.mxu0
      %v2352 = vadd.f32 %v1474, %v2351
      %v2353 = vpop.f32.mrf.mxu0
      %2354 = vmatprep.mubr.f32.mxu0 0.0
      %2355 = vmatmul.mubr.f32.gmra.mxu0 %v1582
      %v2356 = vpop.f32.mrf.mxu0
      %v2357 = vadd.f32 %v1474, %v2356
      %v2358 = vpop.f32.mrf.mxu0
      %2359 = vmatprep.mubr.f32.mxu0 0.0
      %2360 = vmatmul.mubr.f32.gmra.mxu0 %v1585
      %v2361 = vpop.f32.mrf.mxu0
      %v2362 = vadd.f32 %v1474, %v2361
      %v2363 = vpop.f32.mrf.mxu0
      %2364 = vmatprep.mubr.f32.mxu0 0.0
      %2365 = vmatmul.mubr.f32.gmra.mxu0 %v1588
      %v2366 = vpop.f32.mrf.mxu0
      %v2367 = vadd.f32 %v1474, %v2366
      %v2368 = vpop.f32.mrf.mxu0
      %2369 = vmatprep.mubr.f32.mxu0 0.0
      %2370 = vmatmul.mubr.f32.gmra.mxu0 %v1591
      %v2371 = vpop.f32.mrf.mxu0
      %v2372 = vadd.f32 %v1474, %v2371
      %v2373 = vpop.f32.mrf.mxu0
      %2374 = vmatprep.mubr.f32.mxu0 0.0
      %2375 = vmatmul.mubr.f32.gmra.mxu0 %v1594
      %v2376 = vpop.f32.mrf.mxu0
      %v2377 = vadd.f32 %v1474, %v2376
      %v2378 = vpop.f32.mrf.mxu0
      %2379 = vmatprep.mubr.f32.mxu0 0.0
      %2380 = vmatmul.mubr.f32.gmra.mxu0 %v1597
      %v2381 = vpop.f32.mrf.mxu0
      %v2382 = vadd.f32 %v1474, %v2381
      %v2383 = vpop.f32.mrf.mxu0
      %2384 = vmatprep.mubr.f32.mxu0 0.0
      %2385 = vmatmul.mubr.f32.gmra.mxu0 %v1600
      %v2386 = vpop.f32.mrf.mxu0
      %v2387 = vadd.f32 %v1474, %v2386
      %v2388 = vpop.f32.mrf.mxu0
      %2389 = vmatprep.mubr.f32.mxu0 0.0
      %2390 = vmatmul.mubr.f32.gmra.mxu0 %v1603
      %v2391 = vpop.f32.mrf.mxu0
      %v2392 = vadd.f32 %v1474, %v2391
      %v2393 = vpop.f32.mrf.mxu0
      %2394 = vmatprep.mubr.f32.mxu0 0.0
      %2395 = vmatmul.mubr.f32.gmra.mxu0 %v1606
      %v2396 = vpop.f32.mrf.mxu0
      %v2397 = vadd.f32 %v1474, %v2396
      %v2398 = vpop.f32.mrf.mxu0
      %2399 = vmatprep.mubr.f32.mxu0 0.0
      %2400 = vmatmul.mubr.f32.gmra.mxu0 %v1609
      %v2401 = vpop.f32.mrf.mxu0
      %v2402 = vadd.f32 %v1474, %v2401
      %v2403 = vpop.f32.mrf.mxu0
      %2404 = vmatprep.mubr.f32.mxu0 0.0
      %2405 = vmatmul.mubr.f32.gmra.mxu0 %v1612
      %v2406 = vpop.f32.mrf.mxu0
      %v2407 = vadd.f32 %v1474, %v2406
      %v2408 = vpop.f32.mrf.mxu0
      %2409 = vmatprep.mubr.f32.mxu0 0.0
      %2410 = vmatmul.mubr.f32.gmra.mxu0 %v1615
      %v2411 = vpop.f32.mrf.mxu0
      %v2412 = vadd.f32 %v1474, %v2411
      %v2413 = vpop.f32.mrf.mxu0
      %2414 = vmatprep.mubr.f32.mxu0 0.0
      %2415 = vmatmul.mubr.f32.gmra.mxu0 %v1618
      %v2416 = vpop.f32.mrf.mxu0
      %v2417 = vadd.f32 %v1474, %v2416
      %v2418 = vpop.f32.mrf.mxu0
      %2419 = vmatprep.mubr.f32.mxu0 0.0
      %2420 = vmatmul.mubr.f32.gmra.mxu0 %v1621
      %v2421 = vpop.f32.mrf.mxu0
      %v2422 = vadd.f32 %v1474, %v2421
      %v2423 = vpop.f32.mrf.mxu0
      %2424 = vmatprep.mubr.f32.mxu0 0.0
      %2425 = vmatmul.mubr.f32.gmra.mxu0 %v1624
      %v2426 = vpop.f32.mrf.mxu0
      %v2427 = vadd.f32 %v1474, %v2426
      %v2428 = vpop.f32.mrf.mxu0
      %2429 = vmatprep.mubr.f32.mxu0 0.0
      %2430 = vmatmul.mubr.f32.gmra.mxu0 %v1627
      %v2431 = vpop.f32.mrf.mxu0
      %v2432 = vadd.f32 %v1474, %v2431
      %v2433 = vpop.f32.mrf.mxu0
      %2434 = vmatprep.mubr.f32.mxu0 0.0
      %2435 = vmatmul.mubr.f32.gmra.mxu0 %v1630
      %v2436 = vpop.f32.mrf.mxu0
      %v2437 = vadd.f32 %v1474, %v2436
      %v2438 = vpop.f32.mrf.mxu0
      %2439 = vmatprep.mubr.f32.mxu0 0.0
      %2440 = vmatmul.mubr.f32.gmra.mxu0 %v1633
      %v2441 = vpop.f32.mrf.mxu0
      %v2442 = vadd.f32 %v1474, %v2441
      %v2443 = vpop.f32.mrf.mxu0
      %2444 = vmatprep.mubr.f32.mxu0 0.0
      %2445 = vmatmul.mubr.f32.gmra.mxu0 %v1636
      %v2446 = vpop.f32.mrf.mxu0
      %v2447 = vadd.f32 %v1474, %v2446
      %v2448 = vpop.f32.mrf.mxu0
      %2449 = vmatprep.mubr.f32.mxu0 0.0
      %2450 = vmatmul.mubr.f32.gmra.mxu0 %v1639
      %v2451 = vpop.f32.mrf.mxu0
      %v2452 = vadd.f32 %v1474, %v2451
      %v2453 = vpop.f32.mrf.mxu0
      %2454 = vmatprep.mubr.f32.mxu0 0.0
      %2455 = vmatmul.mubr.f32.gmra.mxu0 %v1642
      %v2456 = vpop.f32.mrf.mxu0
      %v2457 = vadd.f32 %v1474, %v2456
      %v2458 = vpop.f32.mrf.mxu0
      %2459 = vmatprep.mubr.f32.mxu0 0.0
      %2460 = vmatmul.mubr.f32.gmra.mxu0 %v1645
      %v2461 = vpop.f32.mrf.mxu0
      %v2462 = vadd.f32 %v1474, %v2461
      %v2463 = vpop.f32.mrf.mxu0
      %2464 = vmatprep.mubr.f32.mxu0 0.0
      %2465 = vmatmul.mubr.f32.gmra.mxu0 %v1648
      %v2466 = vpop.f32.mrf.mxu0
      %v2467 = vadd.f32 %v1474, %v2466
      %v2468 = vpop.f32.mrf.mxu0
      %2469 = vmatprep.mubr.f32.mxu0 0.0
      %2470 = vmatmul.mubr.f32.gmra.mxu0 %v1651
      %v2471 = vpop.f32.mrf.mxu0
      %v2472 = vadd.f32 %v1474, %v2471
      %v2473 = vpop.f32.mrf.mxu0
      %2474 = vmatprep.mubr.f32.mxu0 0.0
      %2475 = vmatmul.mubr.f32.gmra.mxu0 %v1654
      %v2476 = vpop.f32.mrf.mxu0
      %v2477 = vadd.f32 %v1474, %v2476
      %v2478 = vpop.f32.mrf.mxu0
      %2479 = vmatprep.mubr.f32.mxu0 0.0
      %2480 = vmatmul.mubr.f32.gmra.mxu0 %v1657
      %v2481 = vpop.f32.mrf.mxu0
      %v2482 = vadd.f32 %v1474, %v2481
      %v2483 = vpop.f32.mrf.mxu0
      %2484 = vmatprep.mubr.f32.mxu0 0.0
      %2485 = vmatmul.mubr.f32.gmra.mxu0 %v1660
      %v2486 = vpop.f32.mrf.mxu0
      %v2487 = vadd.f32 %v1474, %v2486
      %v2488 = vpop.f32.mrf.mxu0
      %2489 = vmatprep.mubr.f32.mxu0 0.0
      %2490 = vmatmul.mubr.f32.gmra.mxu0 %v1663
      %v2491 = vpop.f32.mrf.mxu0
      %v2492 = vadd.f32 %v1474, %v2491
      %v2493 = vpop.f32.mrf.mxu0
      %2494 = vmatprep.mubr.f32.mxu0 0.0
      %2495 = vmatmul.mubr.f32.gmra.mxu0 %v1666
      %v2496 = vpop.f32.mrf.mxu0
      %v2497 = vadd.f32 %v1474, %v2496
      %v2498 = vpop.f32.mrf.mxu0
      %2499 = vmatprep.mubr.f32.mxu0 0.0
      %2500 = vmatmul.mubr.f32.gmra.mxu0 %v1669
      %v2501 = vpop.f32.mrf.mxu0
      %v2502 = vadd.f32 %v1474, %v2501
      %v2503 = vpop.f32.mrf.mxu0
      %2504 = vdwg.mxu0
      %2505 = vst [vmem:[%s231] sm:$0xff] %v1738
      %2506 = vst [vmem:[%s231 + $0x8] sm:$0xff] %v1740
      %vm2507 = vcmask 334848
      %2508 = vst.msk [vmem:[%s231 + $0x10] sm:$0xff] %vm2507, %v2187
      %2509 = vst [vmem:[%s231 + $0x18] sm:$0xff] %v1744
      %2510 = vst [vmem:[%s231 + $0x20] sm:$0xff] %v1746
      %2511 = vst.msk [vmem:[%s231 + $0x28] sm:$0xff] %vm2507, %v2192
      %2512 = vst [vmem:[%s231 + $0x30] sm:$0xff] %v1750
      %2513 = vst [vmem:[%s231 + $0x38] sm:$0xff] %v1752
      %2514 = vst.msk [vmem:[%s231 + $0x40] sm:$0xff] %vm2507, %v2197
      %2515 = vst [vmem:[%s231 + $0x48] sm:$0xff] %v1756
      %2516 = vst [vmem:[%s231 + $0x50] sm:$0xff] %v1758
      %2517 = vst.msk [vmem:[%s231 + $0x58] sm:$0xff] %vm2507, %v2202
      %2518 = vst [vmem:[%s231 + $0x60] sm:$0xff] %v1762
      %2519 = vst [vmem:[%s231 + $0x68] sm:$0xff] %v1764
      %2520 = vst.msk [vmem:[%s231 + $0x70] sm:$0xff] %vm2507, %v2207
      %2521 = vst [vmem:[%s231 + $0x78] sm:$0xff] %v1768
      %2522 = vst [vmem:[%s231 + $0x80] sm:$0xff] %v1770
      %2523 = vst.msk [vmem:[%s231 + $0x88] sm:$0xff] %vm2507, %v2212
      %2524 = vst [vmem:[%s231 + $0x90] sm:$0xff] %v1774
      %2525 = vst [vmem:[%s231 + $0x98] sm:$0xff] %v1776
      %2526 = vst.msk [vmem:[%s231 + $0xa0] sm:$0xff] %vm2507, %v2217
      %2527 = vst [vmem:[%s231 + $0xa8] sm:$0xff] %v1780
      %2528 = vst [vmem:[%s231 + $0xb0] sm:$0xff] %v1782
      %2529 = vst.msk [vmem:[%s231 + $0xb8] sm:$0xff] %vm2507, %v2222
      %2530 = vst [vmem:[%s231 + $0xc0] sm:$0xff] %v1786
      %2531 = vst [vmem:[%s231 + $0xc8] sm:$0xff] %v1788
      %2532 = vst.msk [vmem:[%s231 + $0xd0] sm:$0xff] %vm2507, %v2227
      %2533 = vst [vmem:[%s231 + $0xd8] sm:$0xff] %v1792
      %2534 = vst [vmem:[%s231 + $0xe0] sm:$0xff] %v1794
      %2535 = vst.msk [vmem:[%s231 + $0xe8] sm:$0xff] %vm2507, %v2232
      %2536 = vst [vmem:[%s231 + $0xf0] sm:$0xff] %v1798
      %2537 = vst [vmem:[%s231 + $0xf8] sm:$0xff] %v1800
      %2538 = vst.msk [vmem:[%s231 + $0x100] sm:$0xff] %vm2507, %v2237
      %2539 = vst [vmem:[%s231 + $0x108] sm:$0xff] %v1804
      %2540 = vst [vmem:[%s231 + $0x110] sm:$0xff] %v1806
      %2541 = vst.msk [vmem:[%s231 + $0x118] sm:$0xff] %vm2507, %v2242
      %2542 = vst [vmem:[%s231 + $0x120] sm:$0xff] %v1810
      %2543 = vst [vmem:[%s231 + $0x128] sm:$0xff] %v1812
      %2544 = vst.msk [vmem:[%s231 + $0x130] sm:$0xff] %vm2507, %v2247
      %2545 = vst [vmem:[%s231 + $0x138] sm:$0xff] %v1816
      %2546 = vst [vmem:[%s231 + $0x140] sm:$0xff] %v1818
      %2547 = vst.msk [vmem:[%s231 + $0x148] sm:$0xff] %vm2507, %v2252
      %2548 = vst [vmem:[%s231 + $0x150] sm:$0xff] %v1822
      %2549 = vst [vmem:[%s231 + $0x158] sm:$0xff] %v1824
      %2550 = vst.msk [vmem:[%s231 + $0x160] sm:$0xff] %vm2507, %v2257
      %2551 = vst [vmem:[%s231 + $0x168] sm:$0xff] %v1828
      %2552 = vst [vmem:[%s231 + $0x170] sm:$0xff] %v1830
      %2553 = vst.msk [vmem:[%s231 + $0x178] sm:$0xff] %vm2507, %v2262
      %2554 = vst [vmem:[%s231 + $0x180] sm:$0xff] %v1834
      %2555 = vst [vmem:[%s231 + $0x188] sm:$0xff] %v1836
      %2556 = vst.msk [vmem:[%s231 + $0x190] sm:$0xff] %vm2507, %v2267
      %2557 = vst [vmem:[%s231 + $0x198] sm:$0xff] %v1840
      %2558 = vst [vmem:[%s231 + $0x1a0] sm:$0xff] %v1842
      %2559 = vst.msk [vmem:[%s231 + $0x1a8] sm:$0xff] %vm2507, %v2272
      %2560 = vst [vmem:[%s231 + $0x1b0] sm:$0xff] %v1846
      %2561 = vst [vmem:[%s231 + $0x1b8] sm:$0xff] %v1848
      %2562 = vst.msk [vmem:[%s231 + $0x1c0] sm:$0xff] %vm2507, %v2277
      %2563 = vst [vmem:[%s231 + $0x1c8] sm:$0xff] %v1852
      %2564 = vst [vmem:[%s231 + $0x1d0] sm:$0xff] %v1854
      %2565 = vst.msk [vmem:[%s231 + $0x1d8] sm:$0xff] %vm2507, %v2282
      %2566 = vst [vmem:[%s231 + $0x1e0] sm:$0xff] %v1858
      %2567 = vst [vmem:[%s231 + $0x1e8] sm:$0xff] %v1860
      %2568 = vst.msk [vmem:[%s231 + $0x1f0] sm:$0xff] %vm2507, %v2287
      %2569 = vst [vmem:[%s231 + $0x1f8] sm:$0xff] %v1864
      %2570 = vst [vmem:[%s231 + $0x200] sm:$0xff] %v1866
      %2571 = vst.msk [vmem:[%s231 + $0x208] sm:$0xff] %vm2507, %v2292
      %2572 = vst [vmem:[%s231 + $0x210] sm:$0xff] %v1870
      %2573 = vst [vmem:[%s231 + $0x218] sm:$0xff] %v1872
      %2574 = vst.msk [vmem:[%s231 + $0x220] sm:$0xff] %vm2507, %v2297
      %2575 = vst [vmem:[%s231 + $0x228] sm:$0xff] %v1876
      %2576 = vst [vmem:[%s231 + $0x230] sm:$0xff] %v1878
      %2577 = vst.msk [vmem:[%s231 + $0x238] sm:$0xff] %vm2507, %v2302
      %2578 = vst [vmem:[%s231 + $0x240] sm:$0xff] %v1882
      %2579 = vst [vmem:[%s231 + $0x248] sm:$0xff] %v1884
      %2580 = vst.msk [vmem:[%s231 + $0x250] sm:$0xff] %vm2507, %v2307
      %2581 = vst [vmem:[%s231 + $0x258] sm:$0xff] %v1888
      %2582 = vst [vmem:[%s231 + $0x260] sm:$0xff] %v1890
      %2583 = vst.msk [vmem:[%s231 + $0x268] sm:$0xff] %vm2507, %v2312
      %2584 = vst [vmem:[%s231 + $0x270] sm:$0xff] %v1894
      %2585 = vst [vmem:[%s231 + $0x278] sm:$0xff] %v1896
      %2586 = vst.msk [vmem:[%s231 + $0x280] sm:$0xff] %vm2507, %v2317
      %2587 = vst [vmem:[%s231 + $0x288] sm:$0xff] %v1900
      %2588 = vst [vmem:[%s231 + $0x290] sm:$0xff] %v1902
      %2589 = vst.msk [vmem:[%s231 + $0x298] sm:$0xff] %vm2507, %v2322
      %2590 = vst [vmem:[%s231 + $0x2a0] sm:$0xff] %v1906
      %2591 = vst [vmem:[%s231 + $0x2a8] sm:$0xff] %v1908
      %2592 = vst.msk [vmem:[%s231 + $0x2b0] sm:$0xff] %vm2507, %v2327
      %2593 = vst [vmem:[%s231 + $0x2b8] sm:$0xff] %v1912
      %2594 = vst [vmem:[%s231 + $0x2c0] sm:$0xff] %v1914
      %2595 = vst.msk [vmem:[%s231 + $0x2c8] sm:$0xff] %vm2507, %v2332
      %2596 = vst [vmem:[%s231 + $0x2d0] sm:$0xff] %v1918
      %2597 = vst [vmem:[%s231 + $0x2d8] sm:$0xff] %v1920
      %2598 = vst.msk [vmem:[%s231 + $0x2e0] sm:$0xff] %vm2507, %v2337
      %2599 = vst [vmem:[%s231 + $0x2e8] sm:$0xff] %v1924
      %2600 = vst [vmem:[%s231 + $0x2f0] sm:$0xff] %v1926
      %2601 = vst.msk [vmem:[%s231 + $0x2f8] sm:$0xff] %vm2507, %v2342
      %2602 = vst [vmem:[%s231 + $0x300] sm:$0xff] %v1930
      %2603 = vst [vmem:[%s231 + $0x308] sm:$0xff] %v1932
      %2604 = vst.msk [vmem:[%s231 + $0x310] sm:$0xff] %vm2507, %v2347
      %2605 = vst [vmem:[%s231 + $0x318] sm:$0xff] %v1936
      %2606 = vst [vmem:[%s231 + $0x320] sm:$0xff] %v1938
      %2607 = vst.msk [vmem:[%s231 + $0x328] sm:$0xff] %vm2507, %v2352
      %2608 = vst [vmem:[%s231 + $0x330] sm:$0xff] %v1942
      %2609 = vst [vmem:[%s231 + $0x338] sm:$0xff] %v1944
      %2610 = vst.msk [vmem:[%s231 + $0x340] sm:$0xff] %vm2507, %v2357
      %2611 = vst [vmem:[%s231 + $0x348] sm:$0xff] %v1948
      %2612 = vst [vmem:[%s231 + $0x350] sm:$0xff] %v1950
      %2613 = vst.msk [vmem:[%s231 + $0x358] sm:$0xff] %vm2507, %v2362
      %2614 = vst [vmem:[%s231 + $0x360] sm:$0xff] %v1954
      %2615 = vst [vmem:[%s231 + $0x368] sm:$0xff] %v1956
      %2616 = vst.msk [vmem:[%s231 + $0x370] sm:$0xff] %vm2507, %v2367
      %2617 = vst [vmem:[%s231 + $0x378] sm:$0xff] %v1960
      %2618 = vst [vmem:[%s231 + $0x380] sm:$0xff] %v1962
      %2619 = vst.msk [vmem:[%s231 + $0x388] sm:$0xff] %vm2507, %v2372
      %2620 = vst [vmem:[%s231 + $0x390] sm:$0xff] %v1966
      %2621 = vst [vmem:[%s231 + $0x398] sm:$0xff] %v1968
      %2622 = vst.msk [vmem:[%s231 + $0x3a0] sm:$0xff] %vm2507, %v2377
      %2623 = vst [vmem:[%s231 + $0x3a8] sm:$0xff] %v1972
      %2624 = vst [vmem:[%s231 + $0x3b0] sm:$0xff] %v1974
      %2625 = vst.msk [vmem:[%s231 + $0x3b8] sm:$0xff] %vm2507, %v2382
      %2626 = vst [vmem:[%s231 + $0x3c0] sm:$0xff] %v1978
      %2627 = vst [vmem:[%s231 + $0x3c8] sm:$0xff] %v1980
      %2628 = vst.msk [vmem:[%s231 + $0x3d0] sm:$0xff] %vm2507, %v2387
      %2629 = vst [vmem:[%s231 + $0x3d8] sm:$0xff] %v1984
      %2630 = vst [vmem:[%s231 + $0x3e0] sm:$0xff] %v1986
      %2631 = vst.msk [vmem:[%s231 + $0x3e8] sm:$0xff] %vm2507, %v2392
      %2632 = vst [vmem:[%s231 + $0x3f0] sm:$0xff] %v1990
      %2633 = vst [vmem:[%s231 + $0x3f8] sm:$0xff] %v1992
      %2634 = vst.msk [vmem:[%s231 + $0x400] sm:$0xff] %vm2507, %v2397
      %2635 = vst [vmem:[%s231 + $0x408] sm:$0xff] %v1996
      %2636 = vst [vmem:[%s231 + $0x410] sm:$0xff] %v1998
      %2637 = vst.msk [vmem:[%s231 + $0x418] sm:$0xff] %vm2507, %v2402
      %2638 = vst [vmem:[%s231 + $0x420] sm:$0xff] %v2002
      %2639 = vst [vmem:[%s231 + $0x428] sm:$0xff] %v2004
      %2640 = vst.msk [vmem:[%s231 + $0x430] sm:$0xff] %vm2507, %v2407
      %2641 = vst [vmem:[%s231 + $0x438] sm:$0xff] %v2008
      %2642 = vst [vmem:[%s231 + $0x440] sm:$0xff] %v2010
      %2643 = vst.msk [vmem:[%s231 + $0x448] sm:$0xff] %vm2507, %v2412
      %2644 = vst [vmem:[%s231 + $0x450] sm:$0xff] %v2014
      %2645 = vst [vmem:[%s231 + $0x458] sm:$0xff] %v2016
      %2646 = vst.msk [vmem:[%s231 + $0x460] sm:$0xff] %vm2507, %v2417
      %2647 = vst [vmem:[%s231 + $0x468] sm:$0xff] %v2020
      %2648 = vst [vmem:[%s231 + $0x470] sm:$0xff] %v2022
      %2649 = vst.msk [vmem:[%s231 + $0x478] sm:$0xff] %vm2507, %v2422
      %2650 = vst [vmem:[%s231 + $0x480] sm:$0xff] %v2026
      %2651 = vst [vmem:[%s231 + $0x488] sm:$0xff] %v2028
      %2652 = vst.msk [vmem:[%s231 + $0x490] sm:$0xff] %vm2507, %v2427
      %2653 = vst [vmem:[%s231 + $0x498] sm:$0xff] %v2032
      %2654 = vst [vmem:[%s231 + $0x4a0] sm:$0xff] %v2034
      %2655 = vst.msk [vmem:[%s231 + $0x4a8] sm:$0xff] %vm2507, %v2432
      %2656 = vst [vmem:[%s231 + $0x4b0] sm:$0xff] %v2038
      %2657 = vst [vmem:[%s231 + $0x4b8] sm:$0xff] %v2040
      %2658 = vst.msk [vmem:[%s231 + $0x4c0] sm:$0xff] %vm2507, %v2437
      %2659 = vst [vmem:[%s231 + $0x4c8] sm:$0xff] %v2044
      %2660 = vst [vmem:[%s231 + $0x4d0] sm:$0xff] %v2046
      %2661 = vst.msk [vmem:[%s231 + $0x4d8] sm:$0xff] %vm2507, %v2442
      %2662 = vst [vmem:[%s231 + $0x4e0] sm:$0xff] %v2050
      %2663 = vst [vmem:[%s231 + $0x4e8] sm:$0xff] %v2052
      %2664 = vst.msk [vmem:[%s231 + $0x4f0] sm:$0xff] %vm2507, %v2447
      %2665 = vst [vmem:[%s231 + $0x4f8] sm:$0xff] %v2056
      %2666 = vst [vmem:[%s231 + $0x500] sm:$0xff] %v2058
      %2667 = vst.msk [vmem:[%s231 + $0x508] sm:$0xff] %vm2507, %v2452
      %2668 = vst [vmem:[%s231 + $0x510] sm:$0xff] %v2062
      %2669 = vst [vmem:[%s231 + $0x518] sm:$0xff] %v2064
      %2670 = vst.msk [vmem:[%s231 + $0x520] sm:$0xff] %vm2507, %v2457
      %2671 = vst [vmem:[%s231 + $0x528] sm:$0xff] %v2068
      %2672 = vst [vmem:[%s231 + $0x530] sm:$0xff] %v2070
      %2673 = vst.msk [vmem:[%s231 + $0x538] sm:$0xff] %vm2507, %v2462
      %2674 = vst [vmem:[%s231 + $0x540] sm:$0xff] %v2074
      %2675 = vst [vmem:[%s231 + $0x548] sm:$0xff] %v2076
      %2676 = vst.msk [vmem:[%s231 + $0x550] sm:$0xff] %vm2507, %v2467
      %2677 = vst [vmem:[%s231 + $0x558] sm:$0xff] %v2080
      %2678 = vst [vmem:[%s231 + $0x560] sm:$0xff] %v2082
      %2679 = vst.msk [vmem:[%s231 + $0x568] sm:$0xff] %vm2507, %v2472
      %2680 = vst [vmem:[%s231 + $0x570] sm:$0xff] %v2086
      %2681 = vst [vmem:[%s231 + $0x578] sm:$0xff] %v2088
      %2682 = vst.msk [vmem:[%s231 + $0x580] sm:$0xff] %vm2507, %v2477
      %2683 = vst [vmem:[%s231 + $0x588] sm:$0xff] %v2092
      %2684 = vst [vmem:[%s231 + $0x590] sm:$0xff] %v2094
      %2685 = vst.msk [vmem:[%s231 + $0x598] sm:$0xff] %vm2507, %v2482
      %2686 = vst [vmem:[%s231 + $0x5a0] sm:$0xff] %v2098
      %2687 = vst [vmem:[%s231 + $0x5a8] sm:$0xff] %v2100
      %2688 = vst.msk [vmem:[%s231 + $0x5b0] sm:$0xff] %vm2507, %v2487
      %2689 = vst [vmem:[%s231 + $0x5b8] sm:$0xff] %v2104
      %2690 = vst [vmem:[%s231 + $0x5c0] sm:$0xff] %v2106
      %2691 = vst.msk [vmem:[%s231 + $0x5c8] sm:$0xff] %vm2507, %v2492
      %2692 = vst [vmem:[%s231 + $0x5d0] sm:$0xff] %v2110
      %2693 = vst [vmem:[%s231 + $0x5d8] sm:$0xff] %v2112
      %2694 = vst.msk [vmem:[%s231 + $0x5e0] sm:$0xff] %vm2507, %v2497
      %2695 = vst [vmem:[%s231 + $0x5e8] sm:$0xff] %v2116
      %2696 = vst [vmem:[%s231 + $0x5f0] sm:$0xff] %v2118
      %2697 = vst.msk [vmem:[%s231 + $0x5f8] sm:$0xff] %vm2507, %v2502
      %s2698 = smul.u32 64, %s16
      %p2699 = scmp.lt.s32.totalorder %s2698, 127
      %s2700 = scalar_select %p2699, %s2698, 127
      %s2701 = smul.addr %s2700, 3
      %s2702 = smul.addr %s2701, 8
      %s2703 = scalar_lea.vmem %s5, %s2702
      // Predicated region
      $region41: #{tpu_custom_call.1} parent=39 // pred_check
        %p2704 = pneg %p144
      $region42: #{tpu_custom_call.1} parent=39 // pred_check_branch
        %2706 = sbr.rel (%p2704) target = $region44
      $region43: #{tpu_custom_call.1} parent=39 // pred_region
        %s2707 = smul.u32 64, %s16
      $region44: #{tpu_custom_call.1} parent=39 // pred_fallthru
        _
    $region40: #{tpu_custom_call.1} parent=5 // pred_fallthru
      _
    %p2708 = scmp.le.s32.totalorder 2, %s11
    // Predicated region
    $region45: #{tpu_custom_call.1} parent=5 // pred_check
      %p2709 = pneg %p2708
    $region46: #{tpu_custom_call.1} parent=5 // pred_check_branch
      %2711 = sbr.rel (%p2709) target = $region48
    $region47: #{tpu_custom_call.1} parent=5 // pred_region
      %s2712 = ssub.s32 %s11, 2
      // Predicated region
      $region49: #{tpu_custom_call.1} parent=47 // pred_check
        %p2713 = pneg %p150
      $region50: #{tpu_custom_call.1} parent=47 // pred_check_branch
        %2715 = sbr.rel (%p2713) target = $region52
      $region51: #{tpu_custom_call.1} parent=47 // pred_region
        %s2716 = smul.u32 64, %s17
        %p2717 = scmp.lt.s32.totalorder %s2716, 127
        %s2718 = scalar_select %p2717, %s2716, 127
        %s2719 = smul.addr %s2718, 3
        %s2720 = smul.addr %s2719, 8
        %s2721 = scalar_lea.vmem %s5, %s2720
      $region52: #{tpu_custom_call.1} parent=47 // pred_fallthru
        _
    $region48: #{tpu_custom_call.1} parent=5 // pred_fallthru
      _
  $region6: #{tpu_custom_call.1} parent=0 // loop_footer
    %s15 = sadd.s32 1, %s11
  $region7: #{tpu_custom_call.1} parent=0 // loop_footer_branch
    %10 = sbr.rel target = $region3
  $region8: #{tpu_custom_call.1} parent=0 // loop_exit
    _

</llo_original>
